<compile_context>
chip_gen: v6e
topology: v6e:2x2x1
jax: 0.10.0
libtpu: 0.0.40
codegen_flags: <defaults>
</compile_context>

<pallas_src>
import math
import functools

import jax
import jax.numpy as jnp
from jax.experimental import pallas as pl
from jax.experimental.pallas import tpu as pltpu


def _mha_kernel(xq_ref, xk_ref, xv_ref,
                wq_ref, bq_ref, wk_ref, bk_ref, wv_ref, bv_ref,
                wo_ref, bo_ref,
                out_ref, *, h, d_k, scale):
    """One grid step = `bt` flattened batch elements, shape (bt, S, D)."""
    Bt, S, D = xq_ref.shape

    xq = xq_ref[...].reshape(Bt * S, D)      # bf16
    xk = xk_ref[...].reshape(Bt * S, D)
    xv = xv_ref[...].reshape(Bt * S, D)

    # QKV projections: bf16 operands, f32 accumulation on the MXU.
    q = jnp.dot(xq, wq_ref[...], preferred_element_type=jnp.float32) + bq_ref[...]
    k = jnp.dot(xk, wk_ref[...], preferred_element_type=jnp.float32) + bk_ref[...]
    v = jnp.dot(xv, wv_ref[...], preferred_element_type=jnp.float32) + bv_ref[...]

    # Fold 1/sqrt(d_k) into q once (cheaper than scaling the (S, S) scores).
    q = (q * scale).astype(jnp.bfloat16).reshape(Bt, S, D)
    k = k.astype(jnp.bfloat16).reshape(Bt, S, D)
    v = v.astype(jnp.bfloat16).reshape(Bt, S, D)

    out_acc = jnp.zeros((Bt * S, D), jnp.float32)

    # Per-head attention; each head's context is folded straight into the
    # output projection via a slice of Wo (no concat of head outputs).
    for hh in range(h):                      # small static unroll over heads
        lo = hh * d_k
        qh = q[:, :, lo:lo + d_k]            # (Bt, S, d_k) bf16
        kh = k[:, :, lo:lo + d_k]
        vh = v[:, :, lo:lo + d_k]

        # QK^T via a contracted einsum: MXU consumes K directly, no transpose.
        s = jnp.einsum('bqd,bkd->bqk', qh, kh,
                       preferred_element_type=jnp.float32)       # (Bt, S, S) f32

        # Numerically stable softmax in f32; normalization deferred.
        m = jnp.max(s, axis=-1, keepdims=True)
        p = jnp.exp(s - m)                                        # unnormalized
        l = jnp.sum(p, axis=-1, keepdims=True)                    # (Bt, S, 1)

        o_h = jnp.einsum('bqk,bkd->bqd', p.astype(jnp.bfloat16), vh,
                         preferred_element_type=jnp.float32)      # (Bt, S, d_k)
        o_h = o_h * pl.reciprocal(l, approx=True)                 # EUP divide

        # Fold the per-head context into the output projection and accumulate
        # (static, sublane-aligned slice of Wo: lo is a multiple of d_k).
        out_acc = out_acc + jnp.dot(
            o_h.reshape(Bt * S, d_k).astype(jnp.bfloat16),
            wo_ref[lo:lo + d_k, :],
            preferred_element_type=jnp.float32)

    out = out_acc + bo_ref[...]
    out_ref[...] = out.reshape(Bt, S, D).astype(out_ref.dtype)


def multi_headed_attention(query, key, value, params, *, h):
    """query/key/value: (nbatches, N, seq_len, d_model) float32."""
    nbatches, N, S, D = query.shape
    assert D % h == 0
    d_k = D // h
    B = nbatches * N

    # bf16 activations / weights for the MXU; accumulation stays f32 in-kernel.
    xq = query.reshape(B, S, D).astype(jnp.bfloat16)
    xk = key.reshape(B, S, D).astype(jnp.bfloat16)
    xv = value.reshape(B, S, D).astype(jnp.bfloat16)

    # nn.Linear: y = x @ W.T + b  ->  pre-transpose W so the kernel does x @ Wt.
    wq_t = params["wq"].T.astype(jnp.bfloat16)
    wk_t = params["wk"].T.astype(jnp.bfloat16)
    wv_t = params["wv"].T.astype(jnp.bfloat16)
    wo_t = params["wo"].T.astype(jnp.bfloat16)
    bq = params["bq"].reshape(1, D).astype(jnp.float32)
    bk = params["bk"].reshape(1, D).astype(jnp.float32)
    bv = params["bv"].reshape(1, D).astype(jnp.float32)
    bo = params["bo"].reshape(1, D).astype(jnp.float32)

    # Block several batch elements per grid step (amortize the ~0.35us/step
    # overhead at small S*D) while keeping >= 2 steps so both TensorCores of a
    # 2-TC chip get work.  Cap the per-step activation slab (~512 KiB f32 per
    # input slab) so x/q/k/v/scores comfortably fit VMEM at larger shapes.
    slab_bytes = S * D * 4
    bt = max(1, min(B // 2 if B >= 2 else 1,
                    pl.cdiv(512 * 1024, slab_bytes)))
    while B % bt:            # largest divisor of B not exceeding the target
        bt -= 1

    x_spec_in = pl.BlockSpec((bt, S, D), lambda i: (i, 0, 0))
    out_spec = pl.BlockSpec((bt, S, D), lambda i: (i, 0, 0))
    w_spec = pl.BlockSpec((D, D), lambda i: (0, 0))     # resident across steps
    b_spec = pl.BlockSpec((1, D), lambda i: (0, 0))

    out = pl.pallas_call(
        functools.partial(_mha_kernel, h=h, d_k=d_k, scale=1.0 / math.sqrt(d_k)),
        out_shape=jax.ShapeDtypeStruct((B, S, D), jnp.float32),
        grid_spec=pltpu.PrefetchScalarGridSpec(
            num_scalar_prefetch=0,
            grid=(B // bt,),
            in_specs=[x_spec_in, x_spec_in, x_spec_in,
                      w_spec, b_spec, w_spec, b_spec, w_spec, b_spec,
                      w_spec, b_spec],
            out_specs=out_spec,
        ),
        compiler_params=pltpu.CompilerParams(
            dimension_semantics=("parallel",)),
    )(xq, xk, xv, wq_t, bq, wk_t, bk, wv_t, bv, wo_t, bo)

    return out.reshape(nbatches, N, S, D)


def multi_headed_attention_ref(query, key, value, params, *, h):
    """Pure-JAX f32 reference mirroring the PyTorch forward (eval mode)."""
    nbatches, N, S, D = query.shape
    d_k = D // h

    def linear(x, w, b):
        return jnp.einsum("...i,oi->...o", x, w) + b

    q = linear(query, params["wq"], params["bq"])
    k = linear(key, params["wk"], params["bk"])
    v = linear(value, params["wv"], params["bv"])

    def split_heads(x):  # (nb, N, S, D) -> (nb, N, h, S, d_k)
        return x.reshape(nbatches, N, S, h, d_k).transpose(0, 1, 3, 2, 4)

    q, k, v = split_heads(q), split_heads(k), split_heads(v)
    scores = jnp.einsum("bnhsd,bnhtd->bnhst", q, k) / math.sqrt(d_k)
    p = jax.nn.softmax(scores, axis=-1)
    x = jnp.einsum("bnhst,bnhtd->bnhsd", p, v)
    x = x.transpose(0, 1, 3, 2, 4).reshape(nbatches, N, S, D)
    return linear(x, params["wo"], params["bo"])


def init_params(key, d_model):
    """Deterministic nn.Linear-style init: U(-1/sqrt(in), 1/sqrt(in))."""
    bound = 1.0 / math.sqrt(d_model)
    names = ["wq", "bq", "wk", "bk", "wv", "bv", "wo", "bo"]
    keys = jax.random.split(key, len(names))
    params = {}
    for n, k in zip(names, keys):
        shape = (d_model, d_model) if n.startswith("w") else (d_model,)
        params[n] = jax.random.uniform(k, shape, jnp.float32, -bound, bound)
    return params


if __name__ == "__main__":
    nbatches, N, seq_len, d_model, h = 2, 2, 8, 32, 4

    root = jax.random.PRNGKey(0)
    kq, kk, kv, kp = jax.random.split(root, 4)
    query = jax.random.normal(kq, (nbatches, N, seq_len, d_model), jnp.float32)
    key_ = jax.random.normal(kk, (nbatches, N, seq_len, d_model), jnp.float32)
    value = jax.random.normal(kv, (nbatches, N, seq_len, d_model), jnp.float32)
    params = init_params(kp, d_model)

    out = multi_headed_attention(query, key_, value, params, h=h)
    out = jax.block_until_ready(out)

    ref = multi_headed_attention_ref(query, key_, value, params, h=h)
    assert out.shape == (nbatches, N, seq_len, d_model)
    # bf16 matmul operands (f32 accumulation) -> compare against the f32
    # reference with a bf16-appropriate tolerance.
    assert jnp.allclose(out, ref, atol=3e-2, rtol=3e-2), "mismatch vs JAX reference"

    print("KERNEL_OK")
</pallas_src>

<mosaic_0001>
module attributes {stable_mosaic.version = 11 : i64} {
  func.func @_mha_kernel(%arg0: i32, %arg1: memref<2x8x32xbf16, #tpu.memory_space<vmem>>, %arg2: memref<2x8x32xbf16, #tpu.memory_space<vmem>>, %arg3: memref<2x8x32xbf16, #tpu.memory_space<vmem>>, %arg4: memref<32x32xbf16, #tpu.memory_space<vmem>>, %arg5: memref<1x32xf32, #tpu.memory_space<vmem>>, %arg6: memref<32x32xbf16, #tpu.memory_space<vmem>>, %arg7: memref<1x32xf32, #tpu.memory_space<vmem>>, %arg8: memref<32x32xbf16, #tpu.memory_space<vmem>>, %arg9: memref<1x32xf32, #tpu.memory_space<vmem>>, %arg10: memref<32x32xbf16, #tpu.memory_space<vmem>>, %arg11: memref<1x32xf32, #tpu.memory_space<vmem>>, %arg12: memref<2x8x32xf32, #tpu.memory_space<vmem>>) attributes {dimension_semantics = [#tpu.dimension_semantics<parallel>], iteration_bounds = array<i64: 2>, scalar_prefetch = 0 : i64, scratch_operands = 0 : i64, tpu.core_type = #tpu.core_type<tc>, window_params = [{transform_indices = @transform_0, window_bounds = array<i64: 2, 8, 32>}, {transform_indices = @transform_1, window_bounds = array<i64: 2, 8, 32>}, {transform_indices = @transform_2, window_bounds = array<i64: 2, 8, 32>}, {pipeline_mode = #tpu.pipeline_mode<synchronous>, transform_indices = @transform_3, window_bounds = array<i64: 32, 32>}, {pipeline_mode = #tpu.pipeline_mode<synchronous>, transform_indices = @transform_4, window_bounds = array<i64: 1, 32>}, {pipeline_mode = #tpu.pipeline_mode<synchronous>, transform_indices = @transform_5, window_bounds = array<i64: 32, 32>}, {pipeline_mode = #tpu.pipeline_mode<synchronous>, transform_indices = @transform_6, window_bounds = array<i64: 1, 32>}, {pipeline_mode = #tpu.pipeline_mode<synchronous>, transform_indices = @transform_7, window_bounds = array<i64: 32, 32>}, {pipeline_mode = #tpu.pipeline_mode<synchronous>, transform_indices = @transform_8, window_bounds = array<i64: 1, 32>}, {pipeline_mode = #tpu.pipeline_mode<synchronous>, transform_indices = @transform_9, window_bounds = array<i64: 32, 32>}, {pipeline_mode = #tpu.pipeline_mode<synchronous>, transform_indices = @transform_10, window_bounds = array<i64: 1, 32>}, {transform_indices = @transform_11, window_bounds = array<i64: 2, 8, 32>}]} {
    %c0 = arith.constant 0 : index
    %c0_0 = arith.constant 0 : index
    %c0_1 = arith.constant 0 : index
    %0 = vector.load %arg1[%c0, %c0_0, %c0_1] : memref<2x8x32xbf16, #tpu.memory_space<vmem>>, vector<2x8x32xbf16>
    %1 = vector.shape_cast %0 : vector<2x8x32xbf16> to vector<16x32xbf16>
    %c0_2 = arith.constant 0 : index
    %c0_3 = arith.constant 0 : index
    %c0_4 = arith.constant 0 : index
    %2 = vector.load %arg2[%c0_2, %c0_3, %c0_4] : memref<2x8x32xbf16, #tpu.memory_space<vmem>>, vector<2x8x32xbf16>
    %3 = vector.shape_cast %2 : vector<2x8x32xbf16> to vector<16x32xbf16>
    %c0_5 = arith.constant 0 : index
    %c0_6 = arith.constant 0 : index
    %c0_7 = arith.constant 0 : index
    %4 = vector.load %arg3[%c0_5, %c0_6, %c0_7] : memref<2x8x32xbf16, #tpu.memory_space<vmem>>, vector<2x8x32xbf16>
    %5 = vector.shape_cast %4 : vector<2x8x32xbf16> to vector<16x32xbf16>
    %c0_8 = arith.constant 0 : index
    %c0_9 = arith.constant 0 : index
    %6 = vector.load %arg4[%c0_8, %c0_9] : memref<32x32xbf16, #tpu.memory_space<vmem>>, vector<32x32xbf16>
    %cst = arith.constant dense<0.000000e+00> : vector<16x32xf32>
    %7 = tpu.matmul %1, %6, %cst {dimension_numbers = #tpu.dot_dimension_numbers<[1], [0], [0], [1], [0, 0, 1, 1], [], []>} : vector<16x32xbf16>, vector<32x32xbf16>, vector<16x32xf32> -> vector<16x32xf32>
    %c0_10 = arith.constant 0 : index
    %c0_11 = arith.constant 0 : index
    %8 = vector.load %arg5[%c0_10, %c0_11] : memref<1x32xf32, #tpu.memory_space<vmem>>, vector<1x32xf32>
    %9 = vector.broadcast %8 : vector<1x32xf32> to vector<16x32xf32>
    %10 = arith.addf %7, %9 : vector<16x32xf32>
    %c0_12 = arith.constant 0 : index
    %c0_13 = arith.constant 0 : index
    %11 = vector.load %arg6[%c0_12, %c0_13] : memref<32x32xbf16, #tpu.memory_space<vmem>>, vector<32x32xbf16>
    %cst_14 = arith.constant dense<0.000000e+00> : vector<16x32xf32>
    %12 = tpu.matmul %3, %11, %cst_14 {dimension_numbers = #tpu.dot_dimension_numbers<[1], [0], [0], [1], [0, 0, 1, 1], [], []>} : vector<16x32xbf16>, vector<32x32xbf16>, vector<16x32xf32> -> vector<16x32xf32>
    %c0_15 = arith.constant 0 : index
    %c0_16 = arith.constant 0 : index
    %13 = vector.load %arg7[%c0_15, %c0_16] : memref<1x32xf32, #tpu.memory_space<vmem>>, vector<1x32xf32>
    %14 = vector.broadcast %13 : vector<1x32xf32> to vector<16x32xf32>
    %15 = arith.addf %12, %14 : vector<16x32xf32>
    %c0_17 = arith.constant 0 : index
    %c0_18 = arith.constant 0 : index
    %16 = vector.load %arg8[%c0_17, %c0_18] : memref<32x32xbf16, #tpu.memory_space<vmem>>, vector<32x32xbf16>
    %cst_19 = arith.constant dense<0.000000e+00> : vector<16x32xf32>
    %17 = tpu.matmul %5, %16, %cst_19 {dimension_numbers = #tpu.dot_dimension_numbers<[1], [0], [0], [1], [0, 0, 1, 1], [], []>} : vector<16x32xbf16>, vector<32x32xbf16>, vector<16x32xf32> -> vector<16x32xf32>
    %c0_20 = arith.constant 0 : index
    %c0_21 = arith.constant 0 : index
    %18 = vector.load %arg9[%c0_20, %c0_21] : memref<1x32xf32, #tpu.memory_space<vmem>>, vector<1x32xf32>
    %19 = vector.broadcast %18 : vector<1x32xf32> to vector<16x32xf32>
    %20 = arith.addf %17, %19 : vector<16x32xf32>
    %cst_22 = arith.constant 0.353553385 : f32
    %21 = vector.broadcast %cst_22 : f32 to vector<16x32xf32>
    %22 = arith.mulf %10, %21 : vector<16x32xf32>
    %23 = arith.truncf %22 : vector<16x32xf32> to vector<16x32xbf16>
    %24 = vector.shape_cast %23 : vector<16x32xbf16> to vector<2x8x32xbf16>
    %25 = arith.truncf %15 : vector<16x32xf32> to vector<16x32xbf16>
    %26 = vector.shape_cast %25 : vector<16x32xbf16> to vector<2x8x32xbf16>
    %27 = arith.truncf %20 : vector<16x32xf32> to vector<16x32xbf16>
    %28 = vector.shape_cast %27 : vector<16x32xbf16> to vector<2x8x32xbf16>
    %cst_23 = arith.constant 0.000000e+00 : f32
    %29 = vector.broadcast %cst_23 : f32 to vector<16x32xf32>
    %30 = vector.extract_strided_slice %24 {offsets = [0, 0, 0], sizes = [2, 8, 8], strides = [1, 1, 1]} : vector<2x8x32xbf16> to vector<2x8x8xbf16>
    %31 = vector.extract_strided_slice %26 {offsets = [0, 0, 0], sizes = [2, 8, 8], strides = [1, 1, 1]} : vector<2x8x32xbf16> to vector<2x8x8xbf16>
    %32 = vector.extract_strided_slice %28 {offsets = [0, 0, 0], sizes = [2, 8, 8], strides = [1, 1, 1]} : vector<2x8x32xbf16> to vector<2x8x8xbf16>
    "tpu.trace_start"() <{level = 10 : i32, message = "bqd,bkd->bqk"}> : () -> ()
    %cst_24 = arith.constant dense<0.000000e+00> : vector<2x8x8xf32>
    %33 = tpu.matmul %30, %31, %cst_24 {dimension_numbers = #tpu.dot_dimension_numbers<[2], [2], [1], [1], [0, 0, 0, 1, 1, 1], [0], [0]>} : vector<2x8x8xbf16>, vector<2x8x8xbf16>, vector<2x8x8xf32> -> vector<2x8x8xf32>
    "tpu.trace_stop"() : () -> ()
    %cst_25 = arith.constant dense<0xFF800000> : vector<2x8xf32>
    %34 = vector.multi_reduction <maximumf>, %33, %cst_25 [2] : vector<2x8x8xf32> to vector<2x8xf32>
    %35 = vector.shape_cast %34 : vector<2x8xf32> to vector<2x8x1xf32>
    %36 = vector.broadcast %35 : vector<2x8x1xf32> to vector<2x8x8xf32>
    %37 = arith.subf %33, %36 : vector<2x8x8xf32>
    %38 = math.exp %37 : vector<2x8x8xf32>
    %cst_26 = arith.constant dense<0.000000e+00> : vector<2x8xf32>
    %39 = vector.multi_reduction <add>, %38, %cst_26 [2] : vector<2x8x8xf32> to vector<2x8xf32>
    %40 = vector.shape_cast %39 : vector<2x8xf32> to vector<2x8x1xf32>
    %41 = arith.truncf %38 : vector<2x8x8xf32> to vector<2x8x8xbf16>
    "tpu.trace_start"() <{level = 10 : i32, message = "bqk,bkd->bqd"}> : () -> ()
    %cst_27 = arith.constant dense<0.000000e+00> : vector<2x8x8xf32>
    %42 = tpu.matmul %41, %32, %cst_27 {dimension_numbers = #tpu.dot_dimension_numbers<[2], [1], [1], [2], [0, 0, 0, 1, 1, 2], [0], [0]>} : vector<2x8x8xbf16>, vector<2x8x8xbf16>, vector<2x8x8xf32> -> vector<2x8x8xf32>
    "tpu.trace_stop"() : () -> ()
    %43 = tpu.reciprocal %40 {approx = true} : vector<2x8x1xf32> -> vector<2x8x1xf32>
    %44 = vector.broadcast %43 : vector<2x8x1xf32> to vector<2x8x8xf32>
    %45 = arith.mulf %42, %44 : vector<2x8x8xf32>
    %46 = vector.shape_cast %45 : vector<2x8x8xf32> to vector<16x8xf32>
    %47 = arith.truncf %46 : vector<16x8xf32> to vector<16x8xbf16>
    %c0_28 = arith.constant 0 : index
    %c0_29 = arith.constant 0 : index
    %48 = vector.load %arg10[%c0_28, %c0_29] : memref<32x32xbf16, #tpu.memory_space<vmem>>, vector<8x32xbf16>
    %cst_30 = arith.constant dense<0.000000e+00> : vector<16x32xf32>
    %49 = tpu.matmul %47, %48, %cst_30 {dimension_numbers = #tpu.dot_dimension_numbers<[1], [0], [0], [1], [0, 0, 1, 1], [], []>} : vector<16x8xbf16>, vector<8x32xbf16>, vector<16x32xf32> -> vector<16x32xf32>
    %50 = arith.addf %29, %49 : vector<16x32xf32>
    %51 = vector.extract_strided_slice %24 {offsets = [0, 0, 8], sizes = [2, 8, 8], strides = [1, 1, 1]} : vector<2x8x32xbf16> to vector<2x8x8xbf16>
    %52 = vector.extract_strided_slice %26 {offsets = [0, 0, 8], sizes = [2, 8, 8], strides = [1, 1, 1]} : vector<2x8x32xbf16> to vector<2x8x8xbf16>
    %53 = vector.extract_strided_slice %28 {offsets = [0, 0, 8], sizes = [2, 8, 8], strides = [1, 1, 1]} : vector<2x8x32xbf16> to vector<2x8x8xbf16>
    "tpu.trace_start"() <{level = 10 : i32, message = "bqd,bkd->bqk"}> : () -> ()
    %cst_31 = arith.constant dense<0.000000e+00> : vector<2x8x8xf32>
    %54 = tpu.matmul %51, %52, %cst_31 {dimension_numbers = #tpu.dot_dimension_numbers<[2], [2], [1], [1], [0, 0, 0, 1, 1, 1], [0], [0]>} : vector<2x8x8xbf16>, vector<2x8x8xbf16>, vector<2x8x8xf32> -> vector<2x8x8xf32>
    "tpu.trace_stop"() : () -> ()
    %cst_32 = arith.constant dense<0xFF800000> : vector<2x8xf32>
    %55 = vector.multi_reduction <maximumf>, %54, %cst_32 [2] : vector<2x8x8xf32> to vector<2x8xf32>
    %56 = vector.shape_cast %55 : vector<2x8xf32> to vector<2x8x1xf32>
    %57 = vector.broadcast %56 : vector<2x8x1xf32> to vector<2x8x8xf32>
    %58 = arith.subf %54, %57 : vector<2x8x8xf32>
    %59 = math.exp %58 : vector<2x8x8xf32>
    %cst_33 = arith.constant dense<0.000000e+00> : vector<2x8xf32>
    %60 = vector.multi_reduction <add>, %59, %cst_33 [2] : vector<2x8x8xf32> to vector<2x8xf32>
    %61 = vector.shape_cast %60 : vector<2x8xf32> to vector<2x8x1xf32>
    %62 = arith.truncf %59 : vector<2x8x8xf32> to vector<2x8x8xbf16>
    "tpu.trace_start"() <{level = 10 : i32, message = "bqk,bkd->bqd"}> : () -> ()
    %cst_34 = arith.constant dense<0.000000e+00> : vector<2x8x8xf32>
    %63 = tpu.matmul %62, %53, %cst_34 {dimension_numbers = #tpu.dot_dimension_numbers<[2], [1], [1], [2], [0, 0, 0, 1, 1, 2], [0], [0]>} : vector<2x8x8xbf16>, vector<2x8x8xbf16>, vector<2x8x8xf32> -> vector<2x8x8xf32>
    "tpu.trace_stop"() : () -> ()
    %64 = tpu.reciprocal %61 {approx = true} : vector<2x8x1xf32> -> vector<2x8x1xf32>
    %65 = vector.broadcast %64 : vector<2x8x1xf32> to vector<2x8x8xf32>
    %66 = arith.mulf %63, %65 : vector<2x8x8xf32>
    %67 = vector.shape_cast %66 : vector<2x8x8xf32> to vector<16x8xf32>
    %68 = arith.truncf %67 : vector<16x8xf32> to vector<16x8xbf16>
    %c8 = arith.constant 8 : index
    %c0_35 = arith.constant 0 : index
    %69 = vector.load %arg10[%c8, %c0_35] : memref<32x32xbf16, #tpu.memory_space<vmem>>, vector<8x32xbf16>
    %cst_36 = arith.constant dense<0.000000e+00> : vector<16x32xf32>
    %70 = tpu.matmul %68, %69, %cst_36 {dimension_numbers = #tpu.dot_dimension_numbers<[1], [0], [0], [1], [0, 0, 1, 1], [], []>} : vector<16x8xbf16>, vector<8x32xbf16>, vector<16x32xf32> -> vector<16x32xf32>
    %71 = arith.addf %50, %70 : vector<16x32xf32>
    %72 = vector.extract_strided_slice %24 {offsets = [0, 0, 16], sizes = [2, 8, 8], strides = [1, 1, 1]} : vector<2x8x32xbf16> to vector<2x8x8xbf16>
    %73 = vector.extract_strided_slice %26 {offsets = [0, 0, 16], sizes = [2, 8, 8], strides = [1, 1, 1]} : vector<2x8x32xbf16> to vector<2x8x8xbf16>
    %74 = vector.extract_strided_slice %28 {offsets = [0, 0, 16], sizes = [2, 8, 8], strides = [1, 1, 1]} : vector<2x8x32xbf16> to vector<2x8x8xbf16>
    "tpu.trace_start"() <{level = 10 : i32, message = "bqd,bkd->bqk"}> : () -> ()
    %cst_37 = arith.constant dense<0.000000e+00> : vector<2x8x8xf32>
    %75 = tpu.matmul %72, %73, %cst_37 {dimension_numbers = #tpu.dot_dimension_numbers<[2], [2], [1], [1], [0, 0, 0, 1, 1, 1], [0], [0]>} : vector<2x8x8xbf16>, vector<2x8x8xbf16>, vector<2x8x8xf32> -> vector<2x8x8xf32>
    "tpu.trace_stop"() : () -> ()
    %cst_38 = arith.constant dense<0xFF800000> : vector<2x8xf32>
    %76 = vector.multi_reduction <maximumf>, %75, %cst_38 [2] : vector<2x8x8xf32> to vector<2x8xf32>
    %77 = vector.shape_cast %76 : vector<2x8xf32> to vector<2x8x1xf32>
    %78 = vector.broadcast %77 : vector<2x8x1xf32> to vector<2x8x8xf32>
    %79 = arith.subf %75, %78 : vector<2x8x8xf32>
    %80 = math.exp %79 : vector<2x8x8xf32>
    %cst_39 = arith.constant dense<0.000000e+00> : vector<2x8xf32>
    %81 = vector.multi_reduction <add>, %80, %cst_39 [2] : vector<2x8x8xf32> to vector<2x8xf32>
    %82 = vector.shape_cast %81 : vector<2x8xf32> to vector<2x8x1xf32>
    %83 = arith.truncf %80 : vector<2x8x8xf32> to vector<2x8x8xbf16>
    "tpu.trace_start"() <{level = 10 : i32, message = "bqk,bkd->bqd"}> : () -> ()
    %cst_40 = arith.constant dense<0.000000e+00> : vector<2x8x8xf32>
    %84 = tpu.matmul %83, %74, %cst_40 {dimension_numbers = #tpu.dot_dimension_numbers<[2], [1], [1], [2], [0, 0, 0, 1, 1, 2], [0], [0]>} : vector<2x8x8xbf16>, vector<2x8x8xbf16>, vector<2x8x8xf32> -> vector<2x8x8xf32>
    "tpu.trace_stop"() : () -> ()
    %85 = tpu.reciprocal %82 {approx = true} : vector<2x8x1xf32> -> vector<2x8x1xf32>
    %86 = vector.broadcast %85 : vector<2x8x1xf32> to vector<2x8x8xf32>
    %87 = arith.mulf %84, %86 : vector<2x8x8xf32>
    %88 = vector.shape_cast %87 : vector<2x8x8xf32> to vector<16x8xf32>
    %89 = arith.truncf %88 : vector<16x8xf32> to vector<16x8xbf16>
    %c16 = arith.constant 16 : index
    %c0_41 = arith.constant 0 : index
    %90 = vector.load %arg10[%c16, %c0_41] : memref<32x32xbf16, #tpu.memory_space<vmem>>, vector<8x32xbf16>
    %cst_42 = arith.constant dense<0.000000e+00> : vector<16x32xf32>
    %91 = tpu.matmul %89, %90, %cst_42 {dimension_numbers = #tpu.dot_dimension_numbers<[1], [0], [0], [1], [0, 0, 1, 1], [], []>} : vector<16x8xbf16>, vector<8x32xbf16>, vector<16x32xf32> -> vector<16x32xf32>
    %92 = arith.addf %71, %91 : vector<16x32xf32>
    %93 = vector.extract_strided_slice %24 {offsets = [0, 0, 24], sizes = [2, 8, 8], strides = [1, 1, 1]} : vector<2x8x32xbf16> to vector<2x8x8xbf16>
    %94 = vector.extract_strided_slice %26 {offsets = [0, 0, 24], sizes = [2, 8, 8], strides = [1, 1, 1]} : vector<2x8x32xbf16> to vector<2x8x8xbf16>
    %95 = vector.extract_strided_slice %28 {offsets = [0, 0, 24], sizes = [2, 8, 8], strides = [1, 1, 1]} : vector<2x8x32xbf16> to vector<2x8x8xbf16>
    "tpu.trace_start"() <{level = 10 : i32, message = "bqd,bkd->bqk"}> : () -> ()
    %cst_43 = arith.constant dense<0.000000e+00> : vector<2x8x8xf32>
    %96 = tpu.matmul %93, %94, %cst_43 {dimension_numbers = #tpu.dot_dimension_numbers<[2], [2], [1], [1], [0, 0, 0, 1, 1, 1], [0], [0]>} : vector<2x8x8xbf16>, vector<2x8x8xbf16>, vector<2x8x8xf32> -> vector<2x8x8xf32>
    "tpu.trace_stop"() : () -> ()
    %cst_44 = arith.constant dense<0xFF800000> : vector<2x8xf32>
    %97 = vector.multi_reduction <maximumf>, %96, %cst_44 [2] : vector<2x8x8xf32> to vector<2x8xf32>
    %98 = vector.shape_cast %97 : vector<2x8xf32> to vector<2x8x1xf32>
    %99 = vector.broadcast %98 : vector<2x8x1xf32> to vector<2x8x8xf32>
    %100 = arith.subf %96, %99 : vector<2x8x8xf32>
    %101 = math.exp %100 : vector<2x8x8xf32>
    %cst_45 = arith.constant dense<0.000000e+00> : vector<2x8xf32>
    %102 = vector.multi_reduction <add>, %101, %cst_45 [2] : vector<2x8x8xf32> to vector<2x8xf32>
    %103 = vector.shape_cast %102 : vector<2x8xf32> to vector<2x8x1xf32>
    %104 = arith.truncf %101 : vector<2x8x8xf32> to vector<2x8x8xbf16>
    "tpu.trace_start"() <{level = 10 : i32, message = "bqk,bkd->bqd"}> : () -> ()
    %cst_46 = arith.constant dense<0.000000e+00> : vector<2x8x8xf32>
    %105 = tpu.matmul %104, %95, %cst_46 {dimension_numbers = #tpu.dot_dimension_numbers<[2], [1], [1], [2], [0, 0, 0, 1, 1, 2], [0], [0]>} : vector<2x8x8xbf16>, vector<2x8x8xbf16>, vector<2x8x8xf32> -> vector<2x8x8xf32>
    "tpu.trace_stop"() : () -> ()
    %106 = tpu.reciprocal %103 {approx = true} : vector<2x8x1xf32> -> vector<2x8x1xf32>
    %107 = vector.broadcast %106 : vector<2x8x1xf32> to vector<2x8x8xf32>
    %108 = arith.mulf %105, %107 : vector<2x8x8xf32>
    %109 = vector.shape_cast %108 : vector<2x8x8xf32> to vector<16x8xf32>
    %110 = arith.truncf %109 : vector<16x8xf32> to vector<16x8xbf16>
    %c24 = arith.constant 24 : index
    %c0_47 = arith.constant 0 : index
    %111 = vector.load %arg10[%c24, %c0_47] : memref<32x32xbf16, #tpu.memory_space<vmem>>, vector<8x32xbf16>
    %cst_48 = arith.constant dense<0.000000e+00> : vector<16x32xf32>
    %112 = tpu.matmul %110, %111, %cst_48 {dimension_numbers = #tpu.dot_dimension_numbers<[1], [0], [0], [1], [0, 0, 1, 1], [], []>} : vector<16x8xbf16>, vector<8x32xbf16>, vector<16x32xf32> -> vector<16x32xf32>
    %113 = arith.addf %92, %112 : vector<16x32xf32>
    %c0_49 = arith.constant 0 : index
    %c0_50 = arith.constant 0 : index
    %114 = vector.load %arg11[%c0_49, %c0_50] : memref<1x32xf32, #tpu.memory_space<vmem>>, vector<1x32xf32>
    %115 = vector.broadcast %114 : vector<1x32xf32> to vector<16x32xf32>
    %116 = arith.addf %113, %115 : vector<16x32xf32>
    %117 = vector.shape_cast %116 : vector<16x32xf32> to vector<2x8x32xf32>
    %c0_51 = arith.constant 0 : index
    %c0_52 = arith.constant 0 : index
    %c0_53 = arith.constant 0 : index
    %118 = vector.load %arg12[%c0_51, %c0_52, %c0_53] : memref<2x8x32xf32, #tpu.memory_space<vmem>>, vector<2x8x32xf32>
    tpu.vector_store %arg12[%c0_51, %c0_52, %c0_53], %117 {strides = array<i32>} : memref<2x8x32xf32, #tpu.memory_space<vmem>>, vector<2x8x32xf32>,
    return
  }
  func.func @transform_0(%arg0: i32) -> (i32, i32, i32) {
    %c0_i32 = arith.constant 0 : i32
    %c0_i32_0 = arith.constant 0 : i32
    %c0_i32_1 = arith.constant 0 : i32
    return %arg0, %c0_i32, %c0_i32_0 : i32, i32, i32
  }
  func.func @transform_1(%arg0: i32) -> (i32, i32, i32) {
    %c0_i32 = arith.constant 0 : i32
    %c0_i32_0 = arith.constant 0 : i32
    %c0_i32_1 = arith.constant 0 : i32
    return %arg0, %c0_i32, %c0_i32_0 : i32, i32, i32
  }
  func.func @transform_2(%arg0: i32) -> (i32, i32, i32) {
    %c0_i32 = arith.constant 0 : i32
    %c0_i32_0 = arith.constant 0 : i32
    %c0_i32_1 = arith.constant 0 : i32
    return %arg0, %c0_i32, %c0_i32_0 : i32, i32, i32
  }
  func.func @transform_3(%arg0: i32) -> (i32, i32) {
    %c0_i32 = arith.constant 0 : i32
    %c0_i32_0 = arith.constant 0 : i32
    %c0_i32_1 = arith.constant 0 : i32
    return %c0_i32, %c0_i32_0 : i32, i32
  }
  func.func @transform_4(%arg0: i32) -> (i32, i32) {
    %c0_i32 = arith.constant 0 : i32
    %c0_i32_0 = arith.constant 0 : i32
    %c0_i32_1 = arith.constant 0 : i32
    return %c0_i32, %c0_i32_0 : i32, i32
  }
  func.func @transform_5(%arg0: i32) -> (i32, i32) {
    %c0_i32 = arith.constant 0 : i32
    %c0_i32_0 = arith.constant 0 : i32
    %c0_i32_1 = arith.constant 0 : i32
    return %c0_i32, %c0_i32_0 : i32, i32
  }
  func.func @transform_6(%arg0: i32) -> (i32, i32) {
    %c0_i32 = arith.constant 0 : i32
    %c0_i32_0 = arith.constant 0 : i32
    %c0_i32_1 = arith.constant 0 : i32
    return %c0_i32, %c0_i32_0 : i32, i32
  }
  func.func @transform_7(%arg0: i32) -> (i32, i32) {
    %c0_i32 = arith.constant 0 : i32
    %c0_i32_0 = arith.constant 0 : i32
    %c0_i32_1 = arith.constant 0 : i32
    return %c0_i32, %c0_i32_0 : i32, i32
  }
  func.func @transform_8(%arg0: i32) -> (i32, i32) {
    %c0_i32 = arith.constant 0 : i32
    %c0_i32_0 = arith.constant 0 : i32
    %c0_i32_1 = arith.constant 0 : i32
    return %c0_i32, %c0_i32_0 : i32, i32
  }
  func.func @transform_9(%arg0: i32) -> (i32, i32) {
    %c0_i32 = arith.constant 0 : i32
    %c0_i32_0 = arith.constant 0 : i32
    %c0_i32_1 = arith.constant 0 : i32
    return %c0_i32, %c0_i32_0 : i32, i32
  }
  func.func @transform_10(%arg0: i32) -> (i32, i32) {
    %c0_i32 = arith.constant 0 : i32
    %c0_i32_0 = arith.constant 0 : i32
    %c0_i32_1 = arith.constant 0 : i32
    return %c0_i32, %c0_i32_0 : i32, i32
  }
  func.func @transform_11(%arg0: i32) -> (i32, i32, i32) {
    %c0_i32 = arith.constant 0 : i32
    %c0_i32_0 = arith.constant 0 : i32
    %c0_i32_1 = arith.constant 0 : i32
    return %arg0, %c0_i32, %c0_i32_0 : i32, i32, i32
  }
}

</mosaic_0001>

<llo_original>
// kernel: tpu_custom_call.1
$region0: #{tpu_custom_call.1}
  #allocation0 [shape = 'u32[]', space=smem, size = 0x4, offset = 0x4, fixed_abs, tag = 'smem constant byte address 0x4 - core index']
  #allocation1 [shape = 'u32[144,128]{1,0:T(1,128)}', space=vmem, size = 0x12000, scoped, tag = 'internal scratch']
  %s0 = inlined_call_operand.hbm [shape: bf16[4,8,32], index: 0, kind: input, shape index: {}]
  %s1 = inlined_call_operand.hbm [shape: bf16[4,8,32], index: 1, kind: input, shape index: {}]
  %s2 = inlined_call_operand.hbm [shape: bf16[4,8,32], index: 2, kind: input, shape index: {}]
  %s3 = inlined_call_operand.hbm [shape: bf16[32,32], index: 3, kind: input, shape index: {}]
  %s4 = inlined_call_operand.hbm [shape: f32[1,32], index: 4, kind: input, shape index: {}]
  %s5 = inlined_call_operand.hbm [shape: bf16[32,32], index: 5, kind: input, shape index: {}]
  %s6 = inlined_call_operand.hbm [shape: f32[1,32], index: 6, kind: input, shape index: {}]
  %s7 = inlined_call_operand.hbm [shape: bf16[32,32], index: 7, kind: input, shape index: {}]
  %s8 = inlined_call_operand.hbm [shape: f32[1,32], index: 8, kind: input, shape index: {}]
  %s9 = inlined_call_operand.vmem [shape: bf16[32,32], index: 9, kind: input, shape index: {}]
  %s10 = inlined_call_operand.vmem [shape: f32[1,32], index: 10, kind: input, shape index: {}]
  %s11 = inlined_call_operand.hbm [shape: f32[4,8,32], index: 11, kind: output, shape index: {}]
  %s12 = sld [smem:[#allocation0]]
  $region113: #{tpu_custom_call.1} parent=0
    _
  %s14 = ssub.s32 1, %s12
  %s15 = scalar_select 0, %s14, %s12
  $region1: #{tpu_custom_call.1} parent=0
    #allocation2 [shape = 'u8[8192]{0}', space=vmem, size = 0x2000, scoped, tag = 'input window, operand 0']
    #allocation3 [shape = 's32[2]{0}', space=sflag, size = 0x8, scoped, tag = 'scoped memory for tpu_custom_call.1']
    #allocation4 [shape = 's32[2]{0}', space=sflag, size = 0x8, scoped, tag = 'scoped memory for tpu_custom_call.1']
    #allocation5 [shape = 'u8[8192]{0}', space=vmem, size = 0x2000, scoped, tag = 'input window, operand 1']
    #allocation6 [shape = 's32[2]{0}', space=sflag, size = 0x8, scoped, tag = 'scoped memory for tpu_custom_call.1']
    #allocation7 [shape = 'u8[8192]{0}', space=vmem, size = 0x2000, scoped, tag = 'input window, operand 2']
    #allocation8 [shape = 'u8[8192]{0}', space=vmem, size = 0x2000, scoped, tag = 'input window, operand 3, single buffered']
    #allocation9 [shape = 's32[1]{0}', space=sflag, size = 0x4, scoped, tag = 'scoped memory for tpu_custom_call.1']
    #allocation10 [shape = 'u8[512]{0}', space=vmem, size = 0x400, scoped, tag = 'input window, operand 4, single buffered']
    #allocation11 [shape = 'u8[8192]{0}', space=vmem, size = 0x2000, scoped, tag = 'input window, operand 5, single buffered']
    #allocation12 [shape = 's32[1]{0}', space=sflag, size = 0x4, scoped, tag = 'scoped memory for tpu_custom_call.1']
    #allocation13 [shape = 'u8[512]{0}', space=vmem, size = 0x400, scoped, tag = 'input window, operand 6, single buffered']
    #allocation14 [shape = 'u8[8192]{0}', space=vmem, size = 0x2000, scoped, tag = 'input window, operand 7, single buffered']
    #allocation15 [shape = 's32[1]{0}', space=sflag, size = 0x4, scoped, tag = 'scoped memory for tpu_custom_call.1']
    #allocation16 [shape = 'u8[512]{0}', space=vmem, size = 0x400, scoped, tag = 'input window, operand 8, single buffered']
    #allocation17 [shape = 'u8[16384]{0}', space=vmem, size = 0x4000, scoped, tag = 'output window, operand 0']
    %16 = vsyncpa [#allocation3], 0
    %s17 = scalar_lea.sflag [#allocation3], 1
    %18 = vsyncpa %s17, 0
    %19 = vsyncpa [#allocation6], 0
    %s20 = scalar_lea.sflag [#allocation6], 1
    %21 = vsyncpa %s20, 0
    %22 = vsyncpa [#allocation9], 0
    %23 = vsyncpa [#allocation12], 0
    %24 = vsyncpa [#allocation15], 0
    %25 = vsyncpa [#allocation4], 0
    %s26 = scalar_lea.sflag [#allocation4], 1
    %27 = vsyncpa %s26, 0
    loop: start=0, step=1, limit=4
    $region2: #{tpu_custom_call.1} parent=1 // loop_pre_header
      _
    $region3: #{tpu_custom_call.1} parent=1 // loop_header
      %s29 = sphi 0, %s33
      %p30 = scmp.ge.s32.totalorder %s29, 4
      %s39 = sphi 0, %s41
      %s42 = sphi 0, %s39
      %s43 = sphi 0, %s42
      %s59 = sphi 0, %s43
      %s65 = sphi 0, %s67
      %s68 = sphi 0, %s65
      %s69 = sphi 0, %s68
      %s85 = sphi 0, %s69
      %s91 = sphi 0, %s93
      %s94 = sphi 0, %s91
      %s95 = sphi 0, %s94
      %s111 = sphi 0, %s95
      %s115 = sphi 0, %s115
      %s117 = sphi 0, %s115
      %s118 = sphi 0, %s117
      %s132 = sphi 0, %s118
      %s136 = sphi 0, %s136
      %s138 = sphi 0, %s136
      %s139 = sphi 0, %s138
      %s153 = sphi 0, %s139
      %s157 = sphi 0, %s157
      %s159 = sphi 0, %s157
      %s160 = sphi 0, %s159
      %s174 = sphi 0, %s160
      %s178 = sphi 0, %s178
      %s180 = sphi 0, %s178
      %s181 = sphi 0, %s180
      %s195 = sphi 0, %s181
      %s199 = sphi 0, %s199
      %s201 = sphi 0, %s199
      %s202 = sphi 0, %s201
      %s216 = sphi 0, %s202
      %s220 = sphi 0, %s220
      %s222 = sphi 0, %s220
      %s223 = sphi 0, %s222
      %s237 = sphi 0, %s223
      %s241 = sphi 0, %s241
      %s243 = sphi 0, %s241
      %s244 = sphi 0, %s243
      %s258 = sphi 0, %s244
      %s262 = sphi 0, %s262
      %s264 = sphi 0, %s262
      %s265 = sphi 0, %s264
      %s279 = sphi 0, %s265
      %s285 = sphi 0, %s287
      %s288 = sphi 0, %s285
      %s289 = sphi 0, %s288
      %s305 = sphi 0, %s289
    $region4: #{tpu_custom_call.1} parent=1 // loop_header_branch
      %32 = sbr.rel (%p30) target = $region8
    $region5: #{tpu_custom_call.1} parent=1 // loop_body
      %s34 = ssub.s32 %s29, 1
      %s35 = ssub.s32 %s29, 2
      %s36 = sadd.s32 %s29, 1
      %s37 = ssub.s32 %s29, %s36
      %p38 = scmp.eq.s32.totalorder %s37, 0
      %s40 = sadd.s32 %s39, 1
      %s41 = scalar_select %p38, %s39, %s40
      %p44 = pneg %p38
      %p45 = scmp.eq.s32.totalorder %s29, 1
      %p46 = por %p44, %p45
      %p47 = scmp.ne.s32.totalorder %s39, %s42
      %p48 = scmp.eq.s32.totalorder %s29, 0
      %p49 = por %p47, %p48
      %p50 = scmp.ne.s32.totalorder %s39, %s42
      %p51 = scmp.eq.s32.totalorder %s34, 1
      %p52 = por %p50, %p51
      %p53 = scmp.ne.s32.totalorder %s42, %s43
      %p54 = scmp.eq.s32.totalorder %s34, 0
      %p55 = por %p53, %p54
      %p56 = scmp.ne.s32.totalorder %s42, %s43
      %p57 = scmp.eq.s32.totalorder %s35, 1
      %p58 = por %p56, %p57
      %p60 = scmp.ne.s32.totalorder %s43, %s59
      %p61 = scmp.eq.s32.totalorder %s35, 0
      %p62 = por %p60, %p61
      %s63 = ssub.s32 %s29, %s36
      %p64 = scmp.eq.s32.totalorder %s63, 0
      %s66 = sadd.s32 %s65, 1
      %s67 = scalar_select %p64, %s65, %s66
      %p70 = pneg %p64
      %p71 = scmp.eq.s32.totalorder %s29, 1
      %p72 = por %p70, %p71
      %p73 = scmp.ne.s32.totalorder %s65, %s68
      %p74 = scmp.eq.s32.totalorder %s29, 0
      %p75 = por %p73, %p74
      %p76 = scmp.ne.s32.totalorder %s65, %s68
      %p77 = scmp.eq.s32.totalorder %s34, 1
      %p78 = por %p76, %p77
      %p79 = scmp.ne.s32.totalorder %s68, %s69
      %p80 = scmp.eq.s32.totalorder %s34, 0
      %p81 = por %p79, %p80
      %p82 = scmp.ne.s32.totalorder %s68, %s69
      %p83 = scmp.eq.s32.totalorder %s35, 1
      %p84 = por %p82, %p83
      %p86 = scmp.ne.s32.totalorder %s69, %s85
      %p87 = scmp.eq.s32.totalorder %s35, 0
      %p88 = por %p86, %p87
      %s89 = ssub.s32 %s29, %s36
      %p90 = scmp.eq.s32.totalorder %s89, 0
      %s92 = sadd.s32 %s91, 1
      %s93 = scalar_select %p90, %s91, %s92
      %p96 = pneg %p90
      %p97 = scmp.eq.s32.totalorder %s29, 1
      %p98 = por %p96, %p97
      %p99 = scmp.ne.s32.totalorder %s91, %s94
      %p100 = scmp.eq.s32.totalorder %s29, 0
      %p101 = por %p99, %p100
      %p102 = scmp.ne.s32.totalorder %s91, %s94
      %p103 = scmp.eq.s32.totalorder %s34, 1
      %p104 = por %p102, %p103
      %p105 = scmp.ne.s32.totalorder %s94, %s95
      %p106 = scmp.eq.s32.totalorder %s34, 0
      %p107 = por %p105, %p106
      %p108 = scmp.ne.s32.totalorder %s94, %s95
      %p109 = scmp.eq.s32.totalorder %s35, 1
      %p110 = por %p108, %p109
      %p112 = scmp.ne.s32.totalorder %s95, %s111
      %p113 = scmp.eq.s32.totalorder %s35, 0
      %p114 = por %p112, %p113
      %s116 = sadd.s32 %s115, 1
      %p119 = scmp.eq.s32.totalorder %s29, 1
      %p120 = scmp.ne.s32.totalorder %s115, %s117
      %p121 = scmp.eq.s32.totalorder %s29, 0
      %p122 = por %p120, %p121
      %p123 = scmp.ne.s32.totalorder %s115, %s117
      %p124 = scmp.eq.s32.totalorder %s34, 1
      %p125 = por %p123, %p124
      %p126 = scmp.ne.s32.totalorder %s117, %s118
      %p127 = scmp.eq.s32.totalorder %s34, 0
      %p128 = por %p126, %p127
      %p129 = scmp.ne.s32.totalorder %s117, %s118
      %p130 = scmp.eq.s32.totalorder %s35, 1
      %p131 = por %p129, %p130
      %p133 = scmp.ne.s32.totalorder %s118, %s132
      %p134 = scmp.eq.s32.totalorder %s35, 0
      %p135 = por %p133, %p134
      %s137 = sadd.s32 %s136, 1
      %p140 = scmp.eq.s32.totalorder %s29, 1
      %p141 = scmp.ne.s32.totalorder %s136, %s138
      %p142 = scmp.eq.s32.totalorder %s29, 0
      %p143 = por %p141, %p142
      %p144 = scmp.ne.s32.totalorder %s136, %s138
      %p145 = scmp.eq.s32.totalorder %s34, 1
      %p146 = por %p144, %p145
      %p147 = scmp.ne.s32.totalorder %s138, %s139
      %p148 = scmp.eq.s32.totalorder %s34, 0
      %p149 = por %p147, %p148
      %p150 = scmp.ne.s32.totalorder %s138, %s139
      %p151 = scmp.eq.s32.totalorder %s35, 1
      %p152 = por %p150, %p151
      %p154 = scmp.ne.s32.totalorder %s139, %s153
      %p155 = scmp.eq.s32.totalorder %s35, 0
      %p156 = por %p154, %p155
      %s158 = sadd.s32 %s157, 1
      %p161 = scmp.eq.s32.totalorder %s29, 1
      %p162 = scmp.ne.s32.totalorder %s157, %s159
      %p163 = scmp.eq.s32.totalorder %s29, 0
      %p164 = por %p162, %p163
      %p165 = scmp.ne.s32.totalorder %s157, %s159
      %p166 = scmp.eq.s32.totalorder %s34, 1
      %p167 = por %p165, %p166
      %p168 = scmp.ne.s32.totalorder %s159, %s160
      %p169 = scmp.eq.s32.totalorder %s34, 0
      %p170 = por %p168, %p169
      %p171 = scmp.ne.s32.totalorder %s159, %s160
      %p172 = scmp.eq.s32.totalorder %s35, 1
      %p173 = por %p171, %p172
      %p175 = scmp.ne.s32.totalorder %s160, %s174
      %p176 = scmp.eq.s32.totalorder %s35, 0
      %p177 = por %p175, %p176
      %s179 = sadd.s32 %s178, 1
      %p182 = scmp.eq.s32.totalorder %s29, 1
      %p183 = scmp.ne.s32.totalorder %s178, %s180
      %p184 = scmp.eq.s32.totalorder %s29, 0
      %p185 = por %p183, %p184
      %p186 = scmp.ne.s32.totalorder %s178, %s180
      %p187 = scmp.eq.s32.totalorder %s34, 1
      %p188 = por %p186, %p187
      %p189 = scmp.ne.s32.totalorder %s180, %s181
      %p190 = scmp.eq.s32.totalorder %s34, 0
      %p191 = por %p189, %p190
      %p192 = scmp.ne.s32.totalorder %s180, %s181
      %p193 = scmp.eq.s32.totalorder %s35, 1
      %p194 = por %p192, %p193
      %p196 = scmp.ne.s32.totalorder %s181, %s195
      %p197 = scmp.eq.s32.totalorder %s35, 0
      %p198 = por %p196, %p197
      %s200 = sadd.s32 %s199, 1
      %p203 = scmp.eq.s32.totalorder %s29, 1
      %p204 = scmp.ne.s32.totalorder %s199, %s201
      %p205 = scmp.eq.s32.totalorder %s29, 0
      %p206 = por %p204, %p205
      %p207 = scmp.ne.s32.totalorder %s199, %s201
      %p208 = scmp.eq.s32.totalorder %s34, 1
      %p209 = por %p207, %p208
      %p210 = scmp.ne.s32.totalorder %s201, %s202
      %p211 = scmp.eq.s32.totalorder %s34, 0
      %p212 = por %p210, %p211
      %p213 = scmp.ne.s32.totalorder %s201, %s202
      %p214 = scmp.eq.s32.totalorder %s35, 1
      %p215 = por %p213, %p214
      %p217 = scmp.ne.s32.totalorder %s202, %s216
      %p218 = scmp.eq.s32.totalorder %s35, 0
      %p219 = por %p217, %p218
      %s221 = sadd.s32 %s220, 1
      %p224 = scmp.eq.s32.totalorder %s29, 1
      %p225 = scmp.ne.s32.totalorder %s220, %s222
      %p226 = scmp.eq.s32.totalorder %s29, 0
      %p227 = por %p225, %p226
      %p228 = scmp.ne.s32.totalorder %s220, %s222
      %p229 = scmp.eq.s32.totalorder %s34, 1
      %p230 = por %p228, %p229
      %p231 = scmp.ne.s32.totalorder %s222, %s223
      %p232 = scmp.eq.s32.totalorder %s34, 0
      %p233 = por %p231, %p232
      %p234 = scmp.ne.s32.totalorder %s222, %s223
      %p235 = scmp.eq.s32.totalorder %s35, 1
      %p236 = por %p234, %p235
      %p238 = scmp.ne.s32.totalorder %s223, %s237
      %p239 = scmp.eq.s32.totalorder %s35, 0
      %p240 = por %p238, %p239
      %s242 = sadd.s32 %s241, 1
      %p245 = scmp.eq.s32.totalorder %s29, 1
      %p246 = scmp.ne.s32.totalorder %s241, %s243
      %p247 = scmp.eq.s32.totalorder %s29, 0
      %p248 = por %p246, %p247
      %p249 = scmp.ne.s32.totalorder %s241, %s243
      %p250 = scmp.eq.s32.totalorder %s34, 1
      %p251 = por %p249, %p250
      %p252 = scmp.ne.s32.totalorder %s243, %s244
      %p253 = scmp.eq.s32.totalorder %s34, 0
      %p254 = por %p252, %p253
      %p255 = scmp.ne.s32.totalorder %s243, %s244
      %p256 = scmp.eq.s32.totalorder %s35, 1
      %p257 = por %p255, %p256
      %p259 = scmp.ne.s32.totalorder %s244, %s258
      %p260 = scmp.eq.s32.totalorder %s35, 0
      %p261 = por %p259, %p260
      %s263 = sadd.s32 %s262, 1
      %p266 = scmp.eq.s32.totalorder %s29, 1
      %p267 = scmp.ne.s32.totalorder %s262, %s264
      %p268 = scmp.eq.s32.totalorder %s29, 0
      %p269 = por %p267, %p268
      %p270 = scmp.ne.s32.totalorder %s262, %s264
      %p271 = scmp.eq.s32.totalorder %s34, 1
      %p272 = por %p270, %p271
      %p273 = scmp.ne.s32.totalorder %s264, %s265
      %p274 = scmp.eq.s32.totalorder %s34, 0
      %p275 = por %p273, %p274
      %p276 = scmp.ne.s32.totalorder %s264, %s265
      %p277 = scmp.eq.s32.totalorder %s35, 1
      %p278 = por %p276, %p277
      %p280 = scmp.ne.s32.totalorder %s265, %s279
      %p281 = scmp.eq.s32.totalorder %s35, 0
      %p282 = por %p280, %p281
      %s283 = ssub.s32 %s29, %s36
      %p284 = scmp.eq.s32.totalorder %s283, 0
      %s286 = sadd.s32 %s285, 1
      %s287 = scalar_select %p284, %s285, %s286
      %p290 = pneg %p284
      %p291 = scmp.eq.s32.totalorder %s29, 1
      %p292 = por %p290, %p291
      %p293 = scmp.ne.s32.totalorder %s285, %s288
      %p294 = scmp.eq.s32.totalorder %s29, 0
      %p295 = por %p293, %p294
      %p296 = scmp.ne.s32.totalorder %s285, %s288
      %p297 = scmp.eq.s32.totalorder %s34, 1
      %p298 = por %p296, %p297
      %p299 = scmp.ne.s32.totalorder %s288, %s289
      %p300 = scmp.eq.s32.totalorder %s34, 0
      %p301 = por %p299, %p300
      %p302 = scmp.ne.s32.totalorder %s288, %s289
      %p303 = scmp.eq.s32.totalorder %s35, 1
      %p304 = por %p302, %p303
      %p306 = scmp.ne.s32.totalorder %s289, %s305
      %p307 = scmp.eq.s32.totalorder %s35, 0
      %p308 = por %p306, %p307
      %p309 = scmp.le.s32.totalorder 1, %s29
      %p310 = scmp.lt.s32.totalorder %s29, 3
      %p311 = pnand %p309, %p310
      %p312 = pneg %p311
      // Predicated region
      $region9: #{tpu_custom_call.1} parent=5 // pred_check
        _
      $region10: #{tpu_custom_call.1} parent=5 // pred_check_branch
        %314 = sbr.rel (%p311) target = $region12
      $region11: #{tpu_custom_call.1} parent=5 // pred_region
        %s315 = ssub.s32 %s29, 1
        // Predicated region
        $region13: #{tpu_custom_call.1} parent=11 // pred_check
          %p316 = pneg %p128
        $region14: #{tpu_custom_call.1} parent=11 // pred_check_branch
          %318 = sbr.rel (%p316) target = $region16
        $region15: #{tpu_custom_call.1} parent=11 // pred_region
          %s320 = ssub.s32 256, 256
          %321 = vsyncadd [#allocation9], %s320
          %s322 = sshll.u32 [#allocation8], 4
          %s323 = int_to_ptr.vmem [resolvable:$true] %s322
          %328 = dma.hbm_to_vmem [thread:$0]  %s3, 256, %s323, [#allocation9], 64, 64, 4
        $region16: #{tpu_custom_call.1} parent=11 // pred_fallthru
          _
        // Predicated region
        $region17: #{tpu_custom_call.1} parent=11 // pred_check
          %p329 = pneg %p149
        $region18: #{tpu_custom_call.1} parent=11 // pred_check_branch
          %331 = sbr.rel (%p329) target = $region20
        $region19: #{tpu_custom_call.1} parent=11 // pred_region
          %s333 = ssub.s32 16, 16
          %334 = vsyncadd [#allocation9], %s333
          %s336 = sshll.u32 [#allocation10], 4
          %s337 = int_to_ptr.vmem [resolvable:$true] %s336
          %339 = dma.hbm_to_vmem [thread:$0]  %s4, 16, %s337, [#allocation9]
        $region20: #{tpu_custom_call.1} parent=11 // pred_fallthru
          _
        // Predicated region
        $region21: #{tpu_custom_call.1} parent=11 // pred_check
          %p340 = pneg %p170
        $region22: #{tpu_custom_call.1} parent=11 // pred_check_branch
          %342 = sbr.rel (%p340) target = $region24
        $region23: #{tpu_custom_call.1} parent=11 // pred_region
          %s344 = ssub.s32 256, 256
          %345 = vsyncadd [#allocation12], %s344
          %s346 = sshll.u32 [#allocation11], 4
          %s347 = int_to_ptr.vmem [resolvable:$true] %s346
          %352 = dma.hbm_to_vmem [thread:$0]  %s5, 256, %s347, [#allocation12], 64, 64, 4
        $region24: #{tpu_custom_call.1} parent=11 // pred_fallthru
          _
        // Predicated region
        $region25: #{tpu_custom_call.1} parent=11 // pred_check
          %p353 = pneg %p191
        $region26: #{tpu_custom_call.1} parent=11 // pred_check_branch
          %355 = sbr.rel (%p353) target = $region28
        $region27: #{tpu_custom_call.1} parent=11 // pred_region
          %s357 = ssub.s32 16, 16
          %358 = vsyncadd [#allocation12], %s357
          %s360 = sshll.u32 [#allocation13], 4
          %s361 = int_to_ptr.vmem [resolvable:$true] %s360
          %363 = dma.hbm_to_vmem [thread:$0]  %s6, 16, %s361, [#allocation12]
        $region28: #{tpu_custom_call.1} parent=11 // pred_fallthru
          _
        // Predicated region
        $region29: #{tpu_custom_call.1} parent=11 // pred_check
          %p364 = pneg %p212
        $region30: #{tpu_custom_call.1} parent=11 // pred_check_branch
          %366 = sbr.rel (%p364) target = $region32
        $region31: #{tpu_custom_call.1} parent=11 // pred_region
          %s368 = ssub.s32 256, 256
          %369 = vsyncadd [#allocation15], %s368
          %s370 = sshll.u32 [#allocation14], 4
          %s371 = int_to_ptr.vmem [resolvable:$true] %s370
          %376 = dma.hbm_to_vmem [thread:$0]  %s7, 256, %s371, [#allocation15], 64, 64, 4
        $region32: #{tpu_custom_call.1} parent=11 // pred_fallthru
          _
        // Predicated region
        $region33: #{tpu_custom_call.1} parent=11 // pred_check
          %p377 = pneg %p233
        $region34: #{tpu_custom_call.1} parent=11 // pred_check_branch
          %379 = sbr.rel (%p377) target = $region36
        $region35: #{tpu_custom_call.1} parent=11 // pred_region
          %s381 = ssub.s32 16, 16
          %382 = vsyncadd [#allocation15], %s381
          %s384 = sshll.u32 [#allocation16], 4
          %s385 = int_to_ptr.vmem [resolvable:$true] %s384
          %387 = dma.hbm_to_vmem [thread:$0]  %s8, 16, %s385, [#allocation15]
        $region36: #{tpu_custom_call.1} parent=11 // pred_fallthru
          _
        // Predicated region
        $region37: #{tpu_custom_call.1} parent=11 // pred_check
          %p388 = pneg %p254
        $region38: #{tpu_custom_call.1} parent=11 // pred_check_branch
          %390 = sbr.rel (%p388) target = $region40
        $region39: #{tpu_custom_call.1} parent=11 // pred_region
          _
        $region40: #{tpu_custom_call.1} parent=11 // pred_fallthru
          _
        // Predicated region
        $region41: #{tpu_custom_call.1} parent=11 // pred_check
          %p391 = pneg %p275
        $region42: #{tpu_custom_call.1} parent=11 // pred_check_branch
          %393 = sbr.rel (%p391) target = $region44
        $region43: #{tpu_custom_call.1} parent=11 // pred_region
          _
        $region44: #{tpu_custom_call.1} parent=11 // pred_fallthru
          _
      $region12: #{tpu_custom_call.1} parent=5 // pred_fallthru
        _
      %p394 = scmp.lt.s32.totalorder %s29, 2
      // Predicated region
      $region45: #{tpu_custom_call.1} parent=5 // pred_check
        %p395 = pneg %p394
      $region46: #{tpu_custom_call.1} parent=5 // pred_check_branch
        %397 = sbr.rel (%p395) target = $region48
      $region47: #{tpu_custom_call.1} parent=5 // pred_region
        // Predicated region
        $region49: #{tpu_custom_call.1} parent=47 // pred_check
          %p398 = pneg %p49
        $region50: #{tpu_custom_call.1} parent=47 // pred_check_branch
          %400 = sbr.rel (%p398) target = $region52
        $region51: #{tpu_custom_call.1} parent=47 // pred_region
          %s401 = sand.u32 %s39, 1
          %s402 = scalar_lea.sflag [#allocation3], %s401
          %s403 = sand.u32 %s39, 1
          %s404 = smul.addr %s403, 8
          %s405 = scalar_lea.vmem [#allocation2], %s404
          %s406 = smul.u32 2, %s29
          %s408 = ssub.s32 128, 128
          %409 = vsyncadd %s402, %s408
          %s410 = smul.addr %s406, 64
          %s411 = scalar_lea.hbm %s0, %s410
          %s412 = sshll.u32 %s405, 4
          %s413 = int_to_ptr.vmem [resolvable:$true] %s412
          %418 = dma.hbm_to_vmem [thread:$0]  %s411, 128, %s413, %s402, 64, 64, 4
        $region52: #{tpu_custom_call.1} parent=47 // pred_fallthru
          _
        // Predicated region
        $region53: #{tpu_custom_call.1} parent=47 // pred_check
          %p419 = pneg %p75
        $region54: #{tpu_custom_call.1} parent=47 // pred_check_branch
          %421 = sbr.rel (%p419) target = $region56
        $region55: #{tpu_custom_call.1} parent=47 // pred_region
          %s422 = sand.u32 %s29, 1
          %s423 = scalar_lea.sflag [#allocation6], %s422
          %s424 = sand.u32 %s65, 1
          %s425 = smul.addr %s424, 8
          %s426 = scalar_lea.vmem [#allocation5], %s425
          %s427 = smul.u32 2, %s29
          %s429 = ssub.s32 128, 128
          %430 = vsyncadd %s423, %s429
          %s431 = smul.addr %s427, 64
          %s432 = scalar_lea.hbm %s1, %s431
          %s433 = sshll.u32 %s426, 4
          %s434 = int_to_ptr.vmem [resolvable:$true] %s433
          %439 = dma.hbm_to_vmem [thread:$0]  %s432, 128, %s434, %s423, 64, 64, 4
        $region56: #{tpu_custom_call.1} parent=47 // pred_fallthru
          _
        // Predicated region
        $region57: #{tpu_custom_call.1} parent=47 // pred_check
          %p440 = pneg %p101
        $region58: #{tpu_custom_call.1} parent=47 // pred_check_branch
          %442 = sbr.rel (%p440) target = $region60
        $region59: #{tpu_custom_call.1} parent=47 // pred_region
          %s443 = sand.u32 %s29, 1
          %s444 = scalar_lea.sflag [#allocation6], %s443
          %s445 = sand.u32 %s91, 1
          %s446 = smul.addr %s445, 8
          %s447 = scalar_lea.vmem [#allocation7], %s446
          %s448 = smul.u32 2, %s29
          %s450 = ssub.s32 128, 128
          %451 = vsyncadd %s444, %s450
          %s452 = smul.addr %s448, 64
          %s453 = scalar_lea.hbm %s2, %s452
          %s454 = sshll.u32 %s447, 4
          %s455 = int_to_ptr.vmem [resolvable:$true] %s454
          %460 = dma.hbm_to_vmem [thread:$0]  %s453, 128, %s455, %s444, 64, 64, 4
        $region60: #{tpu_custom_call.1} parent=47 // pred_fallthru
          _
      $region48: #{tpu_custom_call.1} parent=5 // pred_fallthru
        _
      %p461 = scmp.le.s32.totalorder 1, %s29
      %p462 = scmp.lt.s32.totalorder %s29, 3
      %p463 = pnand %p461, %p462
      %p464 = pneg %p463
      // Predicated region
      $region61: #{tpu_custom_call.1} parent=5 // pred_check
        _
      $region62: #{tpu_custom_call.1} parent=5 // pred_check_branch
        %466 = sbr.rel (%p463) target = $region64
      $region63: #{tpu_custom_call.1} parent=5 // pred_region
        %s467 = ssub.s32 %s29, 1
        %s468 = sand.u32 %s42, 1
        %s469 = scalar_lea.sflag [#allocation3], %s468
        %s470 = sand.u32 %s42, 1
        %s471 = smul.addr %s470, 8
        %s472 = scalar_lea.vmem [#allocation2], %s471
        // Predicated region
        $region65: #{tpu_custom_call.1} parent=63 // pred_check
          %p473 = pneg %p55
        $region66: #{tpu_custom_call.1} parent=63 // pred_check_branch
          %475 = sbr.rel (%p473) target = $region68
        $region67: #{tpu_custom_call.1} parent=63 // pred_region
          %476 = dma.done %s469, 128
        $region68: #{tpu_custom_call.1} parent=63 // pred_fallthru
          _
        %s477 = sand.u32 %s34, 1
        %s478 = scalar_lea.sflag [#allocation6], %s477
        %s479 = sand.u32 %s68, 1
        %s480 = smul.addr %s479, 8
        %s481 = scalar_lea.vmem [#allocation5], %s480
        // Predicated region
        $region69: #{tpu_custom_call.1} parent=63 // pred_check
          %p482 = pneg %p81
        $region70: #{tpu_custom_call.1} parent=63 // pred_check_branch
          %484 = sbr.rel (%p482) target = $region72
        $region71: #{tpu_custom_call.1} parent=63 // pred_region
          %485 = dma.done %s478, 128
        $region72: #{tpu_custom_call.1} parent=63 // pred_fallthru
          _
        %s486 = sand.u32 %s34, 1
        %s487 = scalar_lea.sflag [#allocation6], %s486
        %s488 = sand.u32 %s94, 1
        %s489 = smul.addr %s488, 8
        %s490 = scalar_lea.vmem [#allocation7], %s489
        // Predicated region
        $region73: #{tpu_custom_call.1} parent=63 // pred_check
          %p491 = pneg %p107
        $region74: #{tpu_custom_call.1} parent=63 // pred_check_branch
          %493 = sbr.rel (%p491) target = $region76
        $region75: #{tpu_custom_call.1} parent=63 // pred_region
          %494 = dma.done %s487, 128
        $region76: #{tpu_custom_call.1} parent=63 // pred_fallthru
          _
        // Predicated region
        $region77: #{tpu_custom_call.1} parent=63 // pred_check
          %p495 = pneg %p128
        $region78: #{tpu_custom_call.1} parent=63 // pred_check_branch
          %497 = sbr.rel (%p495) target = $region80
        $region79: #{tpu_custom_call.1} parent=63 // pred_region
          %498 = dma.done [#allocation9], 256
        $region80: #{tpu_custom_call.1} parent=63 // pred_fallthru
          _
        // Predicated region
        $region81: #{tpu_custom_call.1} parent=63 // pred_check
          %p499 = pneg %p149
        $region82: #{tpu_custom_call.1} parent=63 // pred_check_branch
          %501 = sbr.rel (%p499) target = $region84
        $region83: #{tpu_custom_call.1} parent=63 // pred_region
          %502 = dma.done [#allocation9], 16
        $region84: #{tpu_custom_call.1} parent=63 // pred_fallthru
          _
        // Predicated region
        $region85: #{tpu_custom_call.1} parent=63 // pred_check
          %p503 = pneg %p170
        $region86: #{tpu_custom_call.1} parent=63 // pred_check_branch
          %505 = sbr.rel (%p503) target = $region88
        $region87: #{tpu_custom_call.1} parent=63 // pred_region
          %506 = dma.done [#allocation12], 256
        $region88: #{tpu_custom_call.1} parent=63 // pred_fallthru
          _
        // Predicated region
        $region89: #{tpu_custom_call.1} parent=63 // pred_check
          %p507 = pneg %p191
        $region90: #{tpu_custom_call.1} parent=63 // pred_check_branch
          %509 = sbr.rel (%p507) target = $region92
        $region91: #{tpu_custom_call.1} parent=63 // pred_region
          %510 = dma.done [#allocation12], 16
        $region92: #{tpu_custom_call.1} parent=63 // pred_fallthru
          _
        // Predicated region
        $region93: #{tpu_custom_call.1} parent=63 // pred_check
          %p511 = pneg %p212
        $region94: #{tpu_custom_call.1} parent=63 // pred_check_branch
          %513 = sbr.rel (%p511) target = $region96
        $region95: #{tpu_custom_call.1} parent=63 // pred_region
          %514 = dma.done [#allocation15], 256
        $region96: #{tpu_custom_call.1} parent=63 // pred_fallthru
          _
        // Predicated region
        $region97: #{tpu_custom_call.1} parent=63 // pred_check
          %p515 = pneg %p233
        $region98: #{tpu_custom_call.1} parent=63 // pred_check_branch
          %517 = sbr.rel (%p515) target = $region100
        $region99: #{tpu_custom_call.1} parent=63 // pred_region
          %518 = dma.done [#allocation15], 16
        $region100: #{tpu_custom_call.1} parent=63 // pred_fallthru
          _
        %s519 = sand.u32 %s42, 1
        %s520 = scalar_lea.sflag [#allocation3], %s519
        %s521 = sand.u32 %s42, 1
        %s522 = smul.addr %s521, 8
        %s523 = scalar_lea.vmem [#allocation2], %s522
        %p524 = pneg %p55
        %p525 = pneg %p52
        %s526 = sand.u32 %s34, 1
        %s527 = scalar_lea.sflag [#allocation6], %s526
        %s528 = sand.u32 %s68, 1
        %s529 = smul.addr %s528, 8
        %s530 = scalar_lea.vmem [#allocation5], %s529
        %p531 = pneg %p81
        %p532 = pneg %p78
        %s533 = sand.u32 %s34, 1
        %s534 = scalar_lea.sflag [#allocation6], %s533
        %s535 = sand.u32 %s94, 1
        %s536 = smul.addr %s535, 8
        %s537 = scalar_lea.vmem [#allocation7], %s536
        %p538 = pneg %p107
        %p539 = pneg %p104
        %p540 = pneg %p128
        %p541 = pneg %p125
        %p542 = pneg %p149
        %p543 = pneg %p146
        %p544 = pneg %p170
        %p545 = pneg %p167
        %p546 = pneg %p191
        %p547 = pneg %p188
        %p548 = pneg %p212
        %p549 = pneg %p209
        %p550 = pneg %p233
        %p551 = pneg %p230
        %p552 = pneg %p254
        %p553 = pneg %p251
        %p554 = pneg %p275
        %p555 = pneg %p272
        %p556 = pneg %p301
        %p557 = pneg %p298
        %s558 = sand.u32 %s288, 1
        %s559 = scalar_lea.sflag [#allocation4], %s558
        %s560 = sand.u32 %s288, 1
        %s561 = smul.addr %s560, 16
        %s562 = scalar_lea.vmem [#allocation17], %s561
        %s563 = smul.u32 2, %s34
        %s564 = smul.u32 2, %s34
        %s565 = smul.u32 2, %s34
        %s566 = smul.u32 2, %s34
        %v568 = vld [vmem:[%s472] sm:$0xf]
        %v569 = vld [vmem:[%s472 + $0x4] sm:$0xf]
        %v570 = vld [vmem:[%s481] sm:$0xf]
        %v571 = vld [vmem:[%s481 + $0x4] sm:$0xf]
        %v572 = vld [vmem:[%s490] sm:$0xf]
        %v573 = vld [vmem:[%s490 + $0x4] sm:$0xf]
        %v574 = vld [vmem:[#allocation8] sm:$0xf]
        %v575 = vld [vmem:[#allocation8 + $0x4] sm:$0xf]
        %v576 = vld [vmem:[#allocation8 + $0x8] sm:$0xf]
        %v577 = vld [vmem:[#allocation8 + $0xc] sm:$0xf]
        %v578 = vld [vmem:[#allocation10] sm:$0x1]
        %v580 = vlaneseq
        %v581 = vshrl.u32 %v580, 7
        %v582 = vsub.s32 0, %v581
        %v583 = vrot.slane %v578, %v582
        %v587 = vunpack.c.l.b16 %v568
        %v588 = vunpack.c.l.b16 %v569
        %v589 = vpack.c.b16 %v588, %v587
        %v594 = vunpack.c.l.b16 %v574
        %v595 = vunpack.c.l.b16 %v575
        %v596 = vunpack.c.l.b16 %v576
        %v597 = vunpack.c.l.b16 %v577
        %v598 = vpack.c.b16 %v595, %v594
        %v599 = vpack.c.b16 %v597, %v596
        %vm602 = vcmask 261120
        %v604 = vsel %vm602, %v589, 0
        %606 = vmatprep.subr.bf16.mxu0 0
        %607 = vmatpush1.bf16.msra.mxu0 0
        %608 = vmatprep.subr.bf16.mxu0 0
        %609 = vmatpush1.bf16.msra.mxu0 0
        %610 = vmatprep.subr.bf16.mxu0 0
        %611 = vmatpush1.bf16.msra.mxu0 0
        %612 = vmatprep.subr.bf16.mxu0 0
        %613 = vmatpush1.bf16.msra.mxu0 0
        %614 = vmatprep.subr.bf16.mxu0 0
        %615 = vmatpush1.bf16.msra.mxu0 0
        %616 = vmatprep.subr.bf16.mxu0 0
        %617 = vmatpush1.bf16.msra.mxu0 0
        %618 = vmatprep.subr.bf16.mxu0 0
        %619 = vmatpush1.bf16.msra.mxu0 %v599
        %620 = vmatprep.subr.bf16.mxu0 0
        %621 = vmatpush1.bf16.msra.mxu0 %v598
        %622 = vmatprep.subr.bf16.mxu0 0
        %623 = vmatpush2.bf16.msra.mxu0 0
        %624 = vmatprep.subr.bf16.mxu0 0
        %625 = vmatpush2.bf16.msra.mxu0 0
        %626 = vmatprep.subr.bf16.mxu0 0
        %627 = vmatpush2.bf16.msra.mxu0 0
        %628 = vmatprep.subr.bf16.mxu0 0
        %629 = vmatpush2.bf16.msra.mxu0 0
        %630 = vmatprep.subr.bf16.mxu0 0
        %631 = vmatpush2.bf16.msra.mxu0 0
        %632 = vmatprep.subr.bf16.mxu0 0
        %633 = vmatpush2.bf16.msra.mxu0 0
        %634 = vmatprep.subr.bf16.mxu0 0
        %635 = vmatpush2.bf16.msra.mxu0 0
        %636 = vmatprep.subr.bf16.mxu0 0
        %637 = vmatpush2.bf16.msra.mxu0 0
        %638 = vmatprep.mubr.bf16.mxu0 0
        %639 = vmatmul.mubr.bf16.gmra.mxu0 %v604
        %v640 = vpop.f32.mrf.mxu0
        %v641 = vadd.f32 %v583, %v640
        %v642 = vpop.f32.mrf.mxu0
        %v643 = vpop.f32.mrf.mxu0
        %v644 = vadd.f32 %v583, %v643
        %v645 = vpop.f32.mrf.mxu0
        %646 = vdwg.mxu0
        %v647 = vld [vmem:[#allocation11] sm:$0xf]
        %v648 = vld [vmem:[#allocation11 + $0x4] sm:$0xf]
        %v649 = vld [vmem:[#allocation11 + $0x8] sm:$0xf]
        %v650 = vld [vmem:[#allocation11 + $0xc] sm:$0xf]
        %v651 = vld [vmem:[#allocation13] sm:$0x1]
        %v653 = vlaneseq
        %v654 = vshrl.u32 %v653, 7
        %v655 = vsub.s32 0, %v654
        %v656 = vrot.slane %v651, %v655
        %v660 = vunpack.c.l.b16 %v570
        %v661 = vunpack.c.l.b16 %v571
        %v662 = vpack.c.b16 %v661, %v660
        %v667 = vunpack.c.l.b16 %v647
        %v668 = vunpack.c.l.b16 %v648
        %v669 = vunpack.c.l.b16 %v649
        %v670 = vunpack.c.l.b16 %v650
        %v671 = vpack.c.b16 %v668, %v667
        %v672 = vpack.c.b16 %v670, %v669
        %v676 = vsel %vm602, %v662, 0
        %678 = vmatprep.subr.bf16.mxu0 0
        %679 = vmatpush1.bf16.msra.mxu0 0
        %680 = vmatprep.subr.bf16.mxu0 0
        %681 = vmatpush1.bf16.msra.mxu0 0
        %682 = vmatprep.subr.bf16.mxu0 0
        %683 = vmatpush1.bf16.msra.mxu0 0
        %684 = vmatprep.subr.bf16.mxu0 0
        %685 = vmatpush1.bf16.msra.mxu0 0
        %686 = vmatprep.subr.bf16.mxu0 0
        %687 = vmatpush1.bf16.msra.mxu0 0
        %688 = vmatprep.subr.bf16.mxu0 0
        %689 = vmatpush1.bf16.msra.mxu0 0
        %690 = vmatprep.subr.bf16.mxu0 0
        %691 = vmatpush1.bf16.msra.mxu0 %v672
        %692 = vmatprep.subr.bf16.mxu0 0
        %693 = vmatpush1.bf16.msra.mxu0 %v671
        %694 = vmatprep.subr.bf16.mxu0 0
        %695 = vmatpush2.bf16.msra.mxu0 0
        %696 = vmatprep.subr.bf16.mxu0 0
        %697 = vmatpush2.bf16.msra.mxu0 0
        %698 = vmatprep.subr.bf16.mxu0 0
        %699 = vmatpush2.bf16.msra.mxu0 0
        %700 = vmatprep.subr.bf16.mxu0 0
        %701 = vmatpush2.bf16.msra.mxu0 0
        %702 = vmatprep.subr.bf16.mxu0 0
        %703 = vmatpush2.bf16.msra.mxu0 0
        %704 = vmatprep.subr.bf16.mxu0 0
        %705 = vmatpush2.bf16.msra.mxu0 0
        %706 = vmatprep.subr.bf16.mxu0 0
        %707 = vmatpush2.bf16.msra.mxu0 0
        %708 = vmatprep.subr.bf16.mxu0 0
        %709 = vmatpush2.bf16.msra.mxu0 0
        %710 = vmatprep.mubr.bf16.mxu0 0
        %711 = vmatmul.mubr.bf16.gmra.mxu0 %v676
        %v712 = vpop.f32.mrf.mxu0
        %v713 = vadd.f32 %v656, %v712
        %v714 = vpop.f32.mrf.mxu0
        %v715 = vpop.f32.mrf.mxu0
        %v716 = vadd.f32 %v656, %v715
        %v717 = vpop.f32.mrf.mxu0
        %718 = vdwg.mxu0
        %v719 = vld [vmem:[#allocation14] sm:$0xf]
        %v720 = vld [vmem:[#allocation14 + $0x4] sm:$0xf]
        %v721 = vld [vmem:[#allocation14 + $0x8] sm:$0xf]
        %v722 = vld [vmem:[#allocation14 + $0xc] sm:$0xf]
        %v723 = vld [vmem:[#allocation16] sm:$0x1]
        %v725 = vlaneseq
        %v726 = vshrl.u32 %v725, 7
        %v727 = vsub.s32 0, %v726
        %v728 = vrot.slane %v723, %v727
        %v732 = vunpack.c.l.b16 %v572
        %v733 = vunpack.c.l.b16 %v573
        %v734 = vpack.c.b16 %v733, %v732
        %v739 = vunpack.c.l.b16 %v719
        %v740 = vunpack.c.l.b16 %v720
        %v741 = vunpack.c.l.b16 %v721
        %v742 = vunpack.c.l.b16 %v722
        %v743 = vpack.c.b16 %v740, %v739
        %v744 = vpack.c.b16 %v742, %v741
        %v748 = vsel %vm602, %v734, 0
        %750 = vmatprep.subr.bf16.mxu0 0
        %751 = vmatpush1.bf16.msra.mxu0 0
        %752 = vmatprep.subr.bf16.mxu0 0
        %753 = vmatpush1.bf16.msra.mxu0 0
        %754 = vmatprep.subr.bf16.mxu0 0
        %755 = vmatpush1.bf16.msra.mxu0 0
        %756 = vmatprep.subr.bf16.mxu0 0
        %757 = vmatpush1.bf16.msra.mxu0 0
        %758 = vmatprep.subr.bf16.mxu0 0
        %759 = vmatpush1.bf16.msra.mxu0 0
        %760 = vmatprep.subr.bf16.mxu0 0
        %761 = vmatpush1.bf16.msra.mxu0 0
        %762 = vmatprep.subr.bf16.mxu0 0
        %763 = vmatpush1.bf16.msra.mxu0 %v744
        %764 = vmatprep.subr.bf16.mxu0 0
        %765 = vmatpush1.bf16.msra.mxu0 %v743
        %766 = vmatprep.subr.bf16.mxu0 0
        %767 = vmatpush2.bf16.msra.mxu0 0
        %768 = vmatprep.subr.bf16.mxu0 0
        %769 = vmatpush2.bf16.msra.mxu0 0
        %770 = vmatprep.subr.bf16.mxu0 0
        %771 = vmatpush2.bf16.msra.mxu0 0
        %772 = vmatprep.subr.bf16.mxu0 0
        %773 = vmatpush2.bf16.msra.mxu0 0
        %774 = vmatprep.subr.bf16.mxu0 0
        %775 = vmatpush2.bf16.msra.mxu0 0
        %776 = vmatprep.subr.bf16.mxu0 0
        %777 = vmatpush2.bf16.msra.mxu0 0
        %778 = vmatprep.subr.bf16.mxu0 0
        %779 = vmatpush2.bf16.msra.mxu0 0
        %780 = vmatprep.subr.bf16.mxu0 0
        %781 = vmatpush2.bf16.msra.mxu0 0
        %782 = vmatprep.mubr.bf16.mxu0 0
        %783 = vmatmul.mubr.bf16.gmra.mxu0 %v748
        %v784 = vpop.f32.mrf.mxu0
        %v785 = vadd.f32 %v728, %v784
        %v786 = vpop.f32.mrf.mxu0
        %v787 = vpop.f32.mrf.mxu0
        %v788 = vadd.f32 %v728, %v787
        %v789 = vpop.f32.mrf.mxu0
        %790 = vdwg.mxu0
        %v791 = vmul.f32 %v641, 0.35355338
        %v792 = vmul.f32 %v644, 0.35355338
        %v793 = vpack.c.bf16 %v792, %v791
        %v795 = vunpack.c.l.b16 %v793
        %v796 = vunpack.c.h.b16 %v793
        %v797 = vpack.c.b16 %v795, %v795
        %v798 = vpack.c.b16 %v796, %v796
        %v799 = vpack.c.bf16 %v716, %v713
        %v801 = vunpack.c.l.b16 %v799
        %v802 = vunpack.c.h.b16 %v799
        %v803 = vpack.c.b16 %v801, %v801
        %v804 = vpack.c.b16 %v802, %v802
        %v805 = vpack.c.bf16 %v788, %v785
        %v807 = vunpack.c.l.b16 %v805
        %v808 = vunpack.c.h.b16 %v805
        %v809 = vpack.c.b16 %v807, %v807
        %v810 = vpack.c.b16 %v808, %v808
        %vm811 = vcmask 64512
        %v813 = vsel %vm811, %v797, 0
        %v816 = vsel %vm811, %v803, 0
        %818 = vmatprep.subr.bf16.mxu0 0
        %819 = vmatpush1.bf16.xpose.msra.mxu0 0
        %820 = vmatprep.subr.bf16.mxu0 0
        %821 = vmatpush1.bf16.xpose.msra.mxu0 0
        %822 = vmatprep.subr.bf16.mxu0 0
        %823 = vmatpush1.bf16.xpose.msra.mxu0 0
        %824 = vmatprep.subr.bf16.mxu0 0
        %825 = vmatpush1.bf16.xpose.msra.mxu0 0
        %826 = vmatprep.subr.bf16.mxu0 0
        %827 = vmatpush1.bf16.xpose.msra.mxu0 0
        %828 = vmatprep.subr.bf16.mxu0 0
        %829 = vmatpush1.bf16.xpose.msra.mxu0 0
        %830 = vmatprep.subr.bf16.mxu0 0
        %831 = vmatpush1.bf16.xpose.msra.mxu0 0
        %832 = vmatprep.subr.bf16.mxu0 0
        %833 = vmatpush1.bf16.xpose.msra.mxu0 %v816
        %834 = vmatprep.subr.bf16.mxu0 0
        %835 = vmatpush2.bf16.xpose.msra.mxu0 0
        %836 = vmatprep.subr.bf16.mxu0 0
        %837 = vmatpush2.bf16.xpose.msra.mxu0 0
        %838 = vmatprep.subr.bf16.mxu0 0
        %839 = vmatpush2.bf16.xpose.msra.mxu0 0
        %840 = vmatprep.subr.bf16.mxu0 0
        %841 = vmatpush2.bf16.xpose.msra.mxu0 0
        %842 = vmatprep.subr.bf16.mxu0 0
        %843 = vmatpush2.bf16.xpose.msra.mxu0 0
        %844 = vmatprep.subr.bf16.mxu0 0
        %845 = vmatpush2.bf16.xpose.msra.mxu0 0
        %846 = vmatprep.subr.bf16.mxu0 0
        %847 = vmatpush2.bf16.xpose.msra.mxu0 0
        %848 = vmatprep.subr.bf16.mxu0 0
        %849 = vmatpush2.bf16.xpose.msra.mxu0 0
        %850 = vmatprep.mubr.bf16.mxu0 0
        %851 = vmatmul.mubr.bf16.gmra.mxu0 %v813
        %v852 = vpop.f32.mrf.mxu0
        %v853 = vadd.f32 0.0, %v852
        %v854 = vpop.f32.mrf.mxu0
        %v855 = vpop.f32.mrf.mxu0
        %v856 = vpop.f32.mrf.mxu0
        %857 = vdwg.mxu0
        %v859 = vsel %vm811, %v798, 0
        %v862 = vsel %vm811, %v804, 0
        %864 = vmatprep.subr.bf16.mxu0 0
        %865 = vmatpush1.bf16.xpose.msra.mxu0 0
        %866 = vmatprep.subr.bf16.mxu0 0
        %867 = vmatpush1.bf16.xpose.msra.mxu0 0
        %868 = vmatprep.subr.bf16.mxu0 0
        %869 = vmatpush1.bf16.xpose.msra.mxu0 0
        %870 = vmatprep.subr.bf16.mxu0 0
        %871 = vmatpush1.bf16.xpose.msra.mxu0 0
        %872 = vmatprep.subr.bf16.mxu0 0
        %873 = vmatpush1.bf16.xpose.msra.mxu0 0
        %874 = vmatprep.subr.bf16.mxu0 0
        %875 = vmatpush1.bf16.xpose.msra.mxu0 0
        %876 = vmatprep.subr.bf16.mxu0 0
        %877 = vmatpush1.bf16.xpose.msra.mxu0 0
        %878 = vmatprep.subr.bf16.mxu0 0
        %879 = vmatpush1.bf16.xpose.msra.mxu0 %v862
        %880 = vmatprep.subr.bf16.mxu0 0
        %881 = vmatpush2.bf16.xpose.msra.mxu0 0
        %882 = vmatprep.subr.bf16.mxu0 0
        %883 = vmatpush2.bf16.xpose.msra.mxu0 0
        %884 = vmatprep.subr.bf16.mxu0 0
        %885 = vmatpush2.bf16.xpose.msra.mxu0 0
        %886 = vmatprep.subr.bf16.mxu0 0
        %887 = vmatpush2.bf16.xpose.msra.mxu0 0
        %888 = vmatprep.subr.bf16.mxu0 0
        %889 = vmatpush2.bf16.xpose.msra.mxu0 0
        %890 = vmatprep.subr.bf16.mxu0 0
        %891 = vmatpush2.bf16.xpose.msra.mxu0 0
        %892 = vmatprep.subr.bf16.mxu0 0
        %893 = vmatpush2.bf16.xpose.msra.mxu0 0
        %894 = vmatprep.subr.bf16.mxu0 0
        %895 = vmatpush2.bf16.xpose.msra.mxu0 0
        %896 = vmatprep.mubr.bf16.mxu0 0
        %897 = vmatmul.mubr.bf16.gmra.mxu0 %v859
        %v898 = vpop.f32.mrf.mxu0
        %v899 = vadd.f32 0.0, %v898
        %v900 = vpop.f32.mrf.mxu0
        %v901 = vpop.f32.mrf.mxu0
        %v902 = vpop.f32.mrf.mxu0
        %903 = vdwg.mxu0
        %v904 = vsel %vm811, %v853, -inf
        %905 = vmax.xlane.f32.xlu0 %v904
        %v906 = vpop.xlane.xlu0 %905
        %v907 = vsel %vm811, %v899, -inf
        %908 = vmax.xlane.f32.xlu0 %v907
        %v909 = vpop.xlane.xlu0 %908
        %v910 = vsub.f32 %v853, %v906
        %v911 = vsub.f32 %v899, %v909
        %v912 = vmul.f32 %v910, 1.442695
        %v913 = vpow.pop %v912
        %v914 = vmul.f32 %v911, 1.442695
        %v915 = vpow.pop %v914
        %v916 = vsel %vm811, %v913, 0.0
        %917 = vadd.xlane.f32.xlu0 %v916
        %v918 = vpop.xlane.xlu0 %917
        %v919 = vsel %vm811, %v915, 0.0
        %920 = vadd.xlane.f32.xlu0 %v919
        %v921 = vpop.xlane.xlu0 %920
        %v922 = vpack.c.bf16 %v913, %v913
        %v923 = vpack.c.bf16 %v915, %v915
        %v925 = vsel %vm811, %v922, 0
        %vm927 = vcmask 1043456
        %v929 = vsel %vm927, %v809, 0
        %931 = vmatprep.subr.bf16.mxu0 0
        %932 = vmatpush1.bf16.msra.mxu0 0
        %933 = vmatprep.subr.bf16.mxu0 0
        %934 = vmatpush1.bf16.msra.mxu0 0
        %935 = vmatprep.subr.bf16.mxu0 0
        %936 = vmatpush1.bf16.msra.mxu0 0
        %937 = vmatprep.subr.bf16.mxu0 0
        %938 = vmatpush1.bf16.msra.mxu0 0
        %939 = vmatprep.subr.bf16.mxu0 0
        %940 = vmatpush1.bf16.msra.mxu0 0
        %941 = vmatprep.subr.bf16.mxu0 0
        %942 = vmatpush1.bf16.msra.mxu0 0
        %943 = vmatprep.subr.bf16.mxu0 0
        %944 = vmatpush1.bf16.msra.mxu0 0
        %945 = vmatprep.subr.bf16.mxu0 0
        %946 = vmatpush1.bf16.msra.mxu0 %v929
        %947 = vmatprep.subr.bf16.mxu0 0
        %948 = vmatpush2.bf16.msra.mxu0 0
        %949 = vmatprep.subr.bf16.mxu0 0
        %950 = vmatpush2.bf16.msra.mxu0 0
        %951 = vmatprep.subr.bf16.mxu0 0
        %952 = vmatpush2.bf16.msra.mxu0 0
        %953 = vmatprep.subr.bf16.mxu0 0
        %954 = vmatpush2.bf16.msra.mxu0 0
        %955 = vmatprep.subr.bf16.mxu0 0
        %956 = vmatpush2.bf16.msra.mxu0 0
        %957 = vmatprep.subr.bf16.mxu0 0
        %958 = vmatpush2.bf16.msra.mxu0 0
        %959 = vmatprep.subr.bf16.mxu0 0
        %960 = vmatpush2.bf16.msra.mxu0 0
        %961 = vmatprep.subr.bf16.mxu0 0
        %962 = vmatpush2.bf16.msra.mxu0 0
        %963 = vmatprep.mubr.bf16.mxu0 0
        %964 = vmatmul.mubr.bf16.gmra.mxu0 %v925
        %v965 = vpop.f32.mrf.mxu0
        %v966 = vadd.f32 0.0, %v965
        %v967 = vpop.f32.mrf.mxu0
        %v968 = vpop.f32.mrf.mxu0
        %v969 = vpop.f32.mrf.mxu0
        %970 = vdwg.mxu0
        %v972 = vsel %vm811, %v923, 0
        %v975 = vsel %vm927, %v810, 0
        %977 = vmatprep.subr.bf16.mxu0 0
        %978 = vmatpush1.bf16.msra.mxu0 0
        %979 = vmatprep.subr.bf16.mxu0 0
        %980 = vmatpush1.bf16.msra.mxu0 0
        %981 = vmatprep.subr.bf16.mxu0 0
        %982 = vmatpush1.bf16.msra.mxu0 0
        %983 = vmatprep.subr.bf16.mxu0 0
        %984 = vmatpush1.bf16.msra.mxu0 0
        %985 = vmatprep.subr.bf16.mxu0 0
        %986 = vmatpush1.bf16.msra.mxu0 0
        %987 = vmatprep.subr.bf16.mxu0 0
        %988 = vmatpush1.bf16.msra.mxu0 0
        %989 = vmatprep.subr.bf16.mxu0 0
        %990 = vmatpush1.bf16.msra.mxu0 0
        %991 = vmatprep.subr.bf16.mxu0 0
        %992 = vmatpush1.bf16.msra.mxu0 %v975
        %993 = vmatprep.subr.bf16.mxu0 0
        %994 = vmatpush2.bf16.msra.mxu0 0
        %995 = vmatprep.subr.bf16.mxu0 0
        %996 = vmatpush2.bf16.msra.mxu0 0
        %997 = vmatprep.subr.bf16.mxu0 0
        %998 = vmatpush2.bf16.msra.mxu0 0
        %999 = vmatprep.subr.bf16.mxu0 0
        %1000 = vmatpush2.bf16.msra.mxu0 0
        %1001 = vmatprep.subr.bf16.mxu0 0
        %1002 = vmatpush2.bf16.msra.mxu0 0
        %1003 = vmatprep.subr.bf16.mxu0 0
        %1004 = vmatpush2.bf16.msra.mxu0 0
        %1005 = vmatprep.subr.bf16.mxu0 0
        %1006 = vmatpush2.bf16.msra.mxu0 0
        %1007 = vmatprep.subr.bf16.mxu0 0
        %1008 = vmatpush2.bf16.msra.mxu0 0
        %1009 = vmatprep.mubr.bf16.mxu0 0
        %1010 = vmatmul.mubr.bf16.gmra.mxu0 %v972
        %v1011 = vpop.f32.mrf.mxu0
        %v1012 = vadd.f32 0.0, %v1011
        %v1013 = vpop.f32.mrf.mxu0
        %v1014 = vpop.f32.mrf.mxu0
        %v1015 = vpop.f32.mrf.mxu0
        %1016 = vdwg.mxu0
        %v1017 = vrcp.pop %v918
        %v1018 = vrcp.pop %v921
        %v1019 = vmul.f32 %v966, %v1017
        %v1020 = vmul.f32 %v1012, %v1018
        %v1021 = vpack.c.bf16 %v1020, %v1019
        %v1022 = vld [vmem:[%s9] sm:$0xf]
        %1023 = vrot.lane.b32.xlu0 %v797, 120
        %v1024 = vpop.permute.xlu0 %1023
        %1025 = vrot.lane.b32.xlu0 %v803, 120
        %v1026 = vpop.permute.xlu0 %1025
        %v1028 = vsel %vm811, %v1024, 0
        %v1031 = vsel %vm811, %v1026, 0
        %1033 = vmatprep.subr.bf16.mxu0 0
        %1034 = vmatpush1.bf16.xpose.msra.mxu0 0
        %1035 = vmatprep.subr.bf16.mxu0 0
        %1036 = vmatpush1.bf16.xpose.msra.mxu0 0
        %1037 = vmatprep.subr.bf16.mxu0 0
        %1038 = vmatpush1.bf16.xpose.msra.mxu0 0
        %1039 = vmatprep.subr.bf16.mxu0 0
        %1040 = vmatpush1.bf16.xpose.msra.mxu0 0
        %1041 = vmatprep.subr.bf16.mxu0 0
        %1042 = vmatpush1.bf16.xpose.msra.mxu0 0
        %1043 = vmatprep.subr.bf16.mxu0 0
        %1044 = vmatpush1.bf16.xpose.msra.mxu0 0
        %1045 = vmatprep.subr.bf16.mxu0 0
        %1046 = vmatpush1.bf16.xpose.msra.mxu0 0
        %1047 = vmatprep.subr.bf16.mxu0 0
        %1048 = vmatpush1.bf16.xpose.msra.mxu0 %v1031
        %1049 = vmatprep.subr.bf16.mxu0 0
        %1050 = vmatpush2.bf16.xpose.msra.mxu0 0
        %1051 = vmatprep.subr.bf16.mxu0 0
        %1052 = vmatpush2.bf16.xpose.msra.mxu0 0
        %1053 = vmatprep.subr.bf16.mxu0 0
        %1054 = vmatpush2.bf16.xpose.msra.mxu0 0
        %1055 = vmatprep.subr.bf16.mxu0 0
        %1056 = vmatpush2.bf16.xpose.msra.mxu0 0
        %1057 = vmatprep.subr.bf16.mxu0 0
        %1058 = vmatpush2.bf16.xpose.msra.mxu0 0
        %1059 = vmatprep.subr.bf16.mxu0 0
        %1060 = vmatpush2.bf16.xpose.msra.mxu0 0
        %1061 = vmatprep.subr.bf16.mxu0 0
        %1062 = vmatpush2.bf16.xpose.msra.mxu0 0
        %1063 = vmatprep.subr.bf16.mxu0 0
        %1064 = vmatpush2.bf16.xpose.msra.mxu0 0
        %1065 = vmatprep.mubr.bf16.mxu0 0
        %1066 = vmatmul.mubr.bf16.gmra.mxu0 %v1028
        %v1067 = vpop.f32.mrf.mxu0
        %v1068 = vadd.f32 0.0, %v1067
        %v1069 = vpop.f32.mrf.mxu0
        %v1070 = vpop.f32.mrf.mxu0
        %v1071 = vpop.f32.mrf.mxu0
        %1072 = vdwg.mxu0
        %1073 = vrot.lane.b32.xlu0 %v798, 120
        %v1074 = vpop.permute.xlu0 %1073
        %1075 = vrot.lane.b32.xlu0 %v804, 120
        %v1076 = vpop.permute.xlu0 %1075
        %v1078 = vsel %vm811, %v1074, 0
        %v1081 = vsel %vm811, %v1076, 0
        %1083 = vmatprep.subr.bf16.mxu0 0
        %1084 = vmatpush1.bf16.xpose.msra.mxu0 0
        %1085 = vmatprep.subr.bf16.mxu0 0
        %1086 = vmatpush1.bf16.xpose.msra.mxu0 0
        %1087 = vmatprep.subr.bf16.mxu0 0
        %1088 = vmatpush1.bf16.xpose.msra.mxu0 0
        %1089 = vmatprep.subr.bf16.mxu0 0
        %1090 = vmatpush1.bf16.xpose.msra.mxu0 0
        %1091 = vmatprep.subr.bf16.mxu0 0
        %1092 = vmatpush1.bf16.xpose.msra.mxu0 0
        %1093 = vmatprep.subr.bf16.mxu0 0
        %1094 = vmatpush1.bf16.xpose.msra.mxu0 0
        %1095 = vmatprep.subr.bf16.mxu0 0
        %1096 = vmatpush1.bf16.xpose.msra.mxu0 0
        %1097 = vmatprep.subr.bf16.mxu0 0
        %1098 = vmatpush1.bf16.xpose.msra.mxu0 %v1081
        %1099 = vmatprep.subr.bf16.mxu0 0
        %1100 = vmatpush2.bf16.xpose.msra.mxu0 0
        %1101 = vmatprep.subr.bf16.mxu0 0
        %1102 = vmatpush2.bf16.xpose.msra.mxu0 0
        %1103 = vmatprep.subr.bf16.mxu0 0
        %1104 = vmatpush2.bf16.xpose.msra.mxu0 0
        %1105 = vmatprep.subr.bf16.mxu0 0
        %1106 = vmatpush2.bf16.xpose.msra.mxu0 0
        %1107 = vmatprep.subr.bf16.mxu0 0
        %1108 = vmatpush2.bf16.xpose.msra.mxu0 0
        %1109 = vmatprep.subr.bf16.mxu0 0
        %1110 = vmatpush2.bf16.xpose.msra.mxu0 0
        %1111 = vmatprep.subr.bf16.mxu0 0
        %1112 = vmatpush2.bf16.xpose.msra.mxu0 0
        %1113 = vmatprep.subr.bf16.mxu0 0
        %1114 = vmatpush2.bf16.xpose.msra.mxu0 0
        %1115 = vmatprep.mubr.bf16.mxu0 0
        %1116 = vmatmul.mubr.bf16.gmra.mxu0 %v1078
        %v1117 = vpop.f32.mrf.mxu0
        %v1118 = vadd.f32 0.0, %v1117
        %v1119 = vpop.f32.mrf.mxu0
        %v1120 = vpop.f32.mrf.mxu0
        %v1121 = vpop.f32.mrf.mxu0
        %1122 = vdwg.mxu0
        %v1123 = vsel %vm811, %v1068, -inf
        %1124 = vmax.xlane.f32.xlu0 %v1123
        %v1125 = vpop.xlane.xlu0 %1124
        %v1126 = vsel %vm811, %v1118, -inf
        %1127 = vmax.xlane.f32.xlu0 %v1126
        %v1128 = vpop.xlane.xlu0 %1127
        %v1129 = vsub.f32 %v1068, %v1125
        %v1130 = vsub.f32 %v1118, %v1128
        %v1131 = vmul.f32 %v1129, 1.442695
        %v1132 = vpow.pop %v1131
        %v1133 = vmul.f32 %v1130, 1.442695
        %v1134 = vpow.pop %v1133
        %v1135 = vsel %vm811, %v1132, 0.0
        %1136 = vadd.xlane.f32.xlu0 %v1135
        %v1137 = vpop.xlane.xlu0 %1136
        %v1138 = vsel %vm811, %v1134, 0.0
        %1139 = vadd.xlane.f32.xlu0 %v1138
        %v1140 = vpop.xlane.xlu0 %1139
        %v1141 = vpack.c.bf16 %v1132, %v1132
        %v1142 = vpack.c.bf16 %v1134, %v1134
        %1143 = vrot.lane.b32.xlu0 %v809, 120
        %v1144 = vpop.permute.xlu0 %1143
        %v1146 = vsel %vm811, %v1141, 0
        %v1149 = vsel %vm927, %v1144, 0
        %1151 = vmatprep.subr.bf16.mxu0 0
        %1152 = vmatpush1.bf16.msra.mxu0 0
        %1153 = vmatprep.subr.bf16.mxu0 0
        %1154 = vmatpush1.bf16.msra.mxu0 0
        %1155 = vmatprep.subr.bf16.mxu0 0
        %1156 = vmatpush1.bf16.msra.mxu0 0
        %1157 = vmatprep.subr.bf16.mxu0 0
        %1158 = vmatpush1.bf16.msra.mxu0 0
        %1159 = vmatprep.subr.bf16.mxu0 0
        %1160 = vmatpush1.bf16.msra.mxu0 0
        %1161 = vmatprep.subr.bf16.mxu0 0
        %1162 = vmatpush1.bf16.msra.mxu0 0
        %1163 = vmatprep.subr.bf16.mxu0 0
        %1164 = vmatpush1.bf16.msra.mxu0 0
        %1165 = vmatprep.subr.bf16.mxu0 0
        %1166 = vmatpush1.bf16.msra.mxu0 %v1149
        %1167 = vmatprep.subr.bf16.mxu0 0
        %1168 = vmatpush2.bf16.msra.mxu0 0
        %1169 = vmatprep.subr.bf16.mxu0 0
        %1170 = vmatpush2.bf16.msra.mxu0 0
        %1171 = vmatprep.subr.bf16.mxu0 0
        %1172 = vmatpush2.bf16.msra.mxu0 0
        %1173 = vmatprep.subr.bf16.mxu0 0
        %1174 = vmatpush2.bf16.msra.mxu0 0
        %1175 = vmatprep.subr.bf16.mxu0 0
        %1176 = vmatpush2.bf16.msra.mxu0 0
        %1177 = vmatprep.subr.bf16.mxu0 0
        %1178 = vmatpush2.bf16.msra.mxu0 0
        %1179 = vmatprep.subr.bf16.mxu0 0
        %1180 = vmatpush2.bf16.msra.mxu0 0
        %1181 = vmatprep.subr.bf16.mxu0 0
        %1182 = vmatpush2.bf16.msra.mxu0 0
        %1183 = vmatprep.mubr.bf16.mxu0 0
        %1184 = vmatmul.mubr.bf16.gmra.mxu0 %v1146
        %v1185 = vpop.f32.mrf.mxu0
        %v1186 = vadd.f32 0.0, %v1185
        %v1187 = vpop.f32.mrf.mxu0
        %v1188 = vpop.f32.mrf.mxu0
        %v1189 = vpop.f32.mrf.mxu0
        %1190 = vdwg.mxu0
        %1191 = vrot.lane.b32.xlu0 %v810, 120
        %v1192 = vpop.permute.xlu0 %1191
        %v1194 = vsel %vm811, %v1142, 0
        %v1197 = vsel %vm927, %v1192, 0
        %1199 = vmatprep.subr.bf16.mxu0 0
        %1200 = vmatpush1.bf16.msra.mxu0 0
        %1201 = vmatprep.subr.bf16.mxu0 0
        %1202 = vmatpush1.bf16.msra.mxu0 0
        %1203 = vmatprep.subr.bf16.mxu0 0
        %1204 = vmatpush1.bf16.msra.mxu0 0
        %1205 = vmatprep.subr.bf16.mxu0 0
        %1206 = vmatpush1.bf16.msra.mxu0 0
        %1207 = vmatprep.subr.bf16.mxu0 0
        %1208 = vmatpush1.bf16.msra.mxu0 0
        %1209 = vmatprep.subr.bf16.mxu0 0
        %1210 = vmatpush1.bf16.msra.mxu0 0
        %1211 = vmatprep.subr.bf16.mxu0 0
        %1212 = vmatpush1.bf16.msra.mxu0 0
        %1213 = vmatprep.subr.bf16.mxu0 0
        %1214 = vmatpush1.bf16.msra.mxu0 %v1197
        %1215 = vmatprep.subr.bf16.mxu0 0
        %1216 = vmatpush2.bf16.msra.mxu0 0
        %1217 = vmatprep.subr.bf16.mxu0 0
        %1218 = vmatpush2.bf16.msra.mxu0 0
        %1219 = vmatprep.subr.bf16.mxu0 0
        %1220 = vmatpush2.bf16.msra.mxu0 0
        %1221 = vmatprep.subr.bf16.mxu0 0
        %1222 = vmatpush2.bf16.msra.mxu0 0
        %1223 = vmatprep.subr.bf16.mxu0 0
        %1224 = vmatpush2.bf16.msra.mxu0 0
        %1225 = vmatprep.subr.bf16.mxu0 0
        %1226 = vmatpush2.bf16.msra.mxu0 0
        %1227 = vmatprep.subr.bf16.mxu0 0
        %1228 = vmatpush2.bf16.msra.mxu0 0
        %1229 = vmatprep.subr.bf16.mxu0 0
        %1230 = vmatpush2.bf16.msra.mxu0 0
        %1231 = vmatprep.mubr.bf16.mxu0 0
        %1232 = vmatmul.mubr.bf16.gmra.mxu0 %v1194
        %v1233 = vpop.f32.mrf.mxu0
        %v1234 = vadd.f32 0.0, %v1233
        %v1235 = vpop.f32.mrf.mxu0
        %v1236 = vpop.f32.mrf.mxu0
        %v1237 = vpop.f32.mrf.mxu0
        %1238 = vdwg.mxu0
        %v1239 = vrcp.pop %v1137
        %v1240 = vrcp.pop %v1140
        %v1241 = vmul.f32 %v1186, %v1239
        %v1242 = vmul.f32 %v1234, %v1240
        %v1243 = vpack.c.bf16 %v1242, %v1241
        %v1244 = vld [vmem:[%s9 + $0x4] sm:$0xf]
        %v1246 = vsel %vm811, %v1243, 0
        %v1249 = vsel %vm927, %v1244, 0
        %1251 = vmatprep.subr.bf16.mxu0 0
        %1252 = vmatpush1.bf16.msra.mxu0 0
        %1253 = vmatprep.subr.bf16.mxu0 0
        %1254 = vmatpush1.bf16.msra.mxu0 0
        %1255 = vmatprep.subr.bf16.mxu0 0
        %1256 = vmatpush1.bf16.msra.mxu0 0
        %1257 = vmatprep.subr.bf16.mxu0 0
        %1258 = vmatpush1.bf16.msra.mxu0 0
        %1259 = vmatprep.subr.bf16.mxu0 0
        %1260 = vmatpush1.bf16.msra.mxu0 0
        %1261 = vmatprep.subr.bf16.mxu0 0
        %1262 = vmatpush1.bf16.msra.mxu0 0
        %1263 = vmatprep.subr.bf16.mxu0 0
        %1264 = vmatpush1.bf16.msra.mxu0 0
        %1265 = vmatprep.subr.bf16.mxu0 0
        %1266 = vmatpush1.bf16.msra.mxu0 %v1249
        %1267 = vmatprep.subr.bf16.mxu0 0
        %1268 = vmatpush2.bf16.msra.mxu0 0
        %1269 = vmatprep.subr.bf16.mxu0 0
        %1270 = vmatpush2.bf16.msra.mxu0 0
        %1271 = vmatprep.subr.bf16.mxu0 0
        %1272 = vmatpush2.bf16.msra.mxu0 0
        %1273 = vmatprep.subr.bf16.mxu0 0
        %1274 = vmatpush2.bf16.msra.mxu0 0
        %1275 = vmatprep.subr.bf16.mxu0 0
        %1276 = vmatpush2.bf16.msra.mxu0 0
        %1277 = vmatprep.subr.bf16.mxu0 0
        %1278 = vmatpush2.bf16.msra.mxu0 0
        %1279 = vmatprep.subr.bf16.mxu0 0
        %1280 = vmatpush2.bf16.msra.mxu0 0
        %1281 = vmatprep.subr.bf16.mxu0 0
        %1282 = vmatpush2.bf16.msra.mxu0 0
        %1283 = vmatprep.mubr.bf16.mxu0 0
        %1284 = vmatmul.mubr.bf16.gmra.mxu0 %v1246
        %v1285 = vpop.f32.mrf.mxu0
        %v1286 = vadd.f32 0.0, %v1285
        %v1287 = vpop.f32.mrf.mxu0
        %v1288 = vpop.f32.mrf.mxu0
        %v1289 = vadd.f32 0.0, %v1288
        %v1290 = vpop.f32.mrf.mxu0
        %1291 = vdwg.mxu0
        %v1293 = vsel %vm811, %v1021, 0
        %v1296 = vsel %vm927, %v1022, 0
        %1298 = vmatprep.subr.bf16.mxu0 0
        %1299 = vmatpush1.bf16.msra.mxu0 0
        %1300 = vmatprep.subr.bf16.mxu0 0
        %1301 = vmatpush1.bf16.msra.mxu0 0
        %1302 = vmatprep.subr.bf16.mxu0 0
        %1303 = vmatpush1.bf16.msra.mxu0 0
        %1304 = vmatprep.subr.bf16.mxu0 0
        %1305 = vmatpush1.bf16.msra.mxu0 0
        %1306 = vmatprep.subr.bf16.mxu0 0
        %1307 = vmatpush1.bf16.msra.mxu0 0
        %1308 = vmatprep.subr.bf16.mxu0 0
        %1309 = vmatpush1.bf16.msra.mxu0 0
        %1310 = vmatprep.subr.bf16.mxu0 0
        %1311 = vmatpush1.bf16.msra.mxu0 0
        %1312 = vmatprep.subr.bf16.mxu0 0
        %1313 = vmatpush1.bf16.msra.mxu0 %v1296
        %1314 = vmatprep.subr.bf16.mxu0 0
        %1315 = vmatpush2.bf16.msra.mxu0 0
        %1316 = vmatprep.subr.bf16.mxu0 0
        %1317 = vmatpush2.bf16.msra.mxu0 0
        %1318 = vmatprep.subr.bf16.mxu0 0
        %1319 = vmatpush2.bf16.msra.mxu0 0
        %1320 = vmatprep.subr.bf16.mxu0 0
        %1321 = vmatpush2.bf16.msra.mxu0 0
        %1322 = vmatprep.subr.bf16.mxu0 0
        %1323 = vmatpush2.bf16.msra.mxu0 0
        %1324 = vmatprep.subr.bf16.mxu0 0
        %1325 = vmatpush2.bf16.msra.mxu0 0
        %1326 = vmatprep.subr.bf16.mxu0 0
        %1327 = vmatpush2.bf16.msra.mxu0 0
        %1328 = vmatprep.subr.bf16.mxu0 0
        %1329 = vmatpush2.bf16.msra.mxu0 0
        %1330 = vmatprep.mubr.bf16.mxu0 0
        %1331 = vmatmul.mubr.bf16.gmra.mxu0 %v1293
        %v1332 = vpop.f32.mrf.mxu0
        %v1333 = vadd.f32 %v1286, %v1332
        %v1334 = vpop.f32.mrf.mxu0
        %v1335 = vpop.f32.mrf.mxu0
        %v1336 = vadd.f32 %v1289, %v1335
        %v1337 = vpop.f32.mrf.mxu0
        %1338 = vdwg.mxu0
        %1339 = vrot.lane.b32.xlu0 %v797, 112
        %v1340 = vpop.permute.xlu0 %1339
        %1341 = vrot.lane.b32.xlu0 %v803, 112
        %v1342 = vpop.permute.xlu0 %1341
        %v1344 = vsel %vm811, %v1340, 0
        %v1347 = vsel %vm811, %v1342, 0
        %1349 = vmatprep.subr.bf16.mxu0 0
        %1350 = vmatpush1.bf16.xpose.msra.mxu0 0
        %1351 = vmatprep.subr.bf16.mxu0 0
        %1352 = vmatpush1.bf16.xpose.msra.mxu0 0
        %1353 = vmatprep.subr.bf16.mxu0 0
        %1354 = vmatpush1.bf16.xpose.msra.mxu0 0
        %1355 = vmatprep.subr.bf16.mxu0 0
        %1356 = vmatpush1.bf16.xpose.msra.mxu0 0
        %1357 = vmatprep.subr.bf16.mxu0 0
        %1358 = vmatpush1.bf16.xpose.msra.mxu0 0
        %1359 = vmatprep.subr.bf16.mxu0 0
        %1360 = vmatpush1.bf16.xpose.msra.mxu0 0
        %1361 = vmatprep.subr.bf16.mxu0 0
        %1362 = vmatpush1.bf16.xpose.msra.mxu0 0
        %1363 = vmatprep.subr.bf16.mxu0 0
        %1364 = vmatpush1.bf16.xpose.msra.mxu0 %v1347
        %1365 = vmatprep.subr.bf16.mxu0 0
        %1366 = vmatpush2.bf16.xpose.msra.mxu0 0
        %1367 = vmatprep.subr.bf16.mxu0 0
        %1368 = vmatpush2.bf16.xpose.msra.mxu0 0
        %1369 = vmatprep.subr.bf16.mxu0 0
        %1370 = vmatpush2.bf16.xpose.msra.mxu0 0
        %1371 = vmatprep.subr.bf16.mxu0 0
        %1372 = vmatpush2.bf16.xpose.msra.mxu0 0
        %1373 = vmatprep.subr.bf16.mxu0 0
        %1374 = vmatpush2.bf16.xpose.msra.mxu0 0
        %1375 = vmatprep.subr.bf16.mxu0 0
        %1376 = vmatpush2.bf16.xpose.msra.mxu0 0
        %1377 = vmatprep.subr.bf16.mxu0 0
        %1378 = vmatpush2.bf16.xpose.msra.mxu0 0
        %1379 = vmatprep.subr.bf16.mxu0 0
        %1380 = vmatpush2.bf16.xpose.msra.mxu0 0
        %1381 = vmatprep.mubr.bf16.mxu0 0
        %1382 = vmatmul.mubr.bf16.gmra.mxu0 %v1344
        %v1383 = vpop.f32.mrf.mxu0
        %v1384 = vadd.f32 0.0, %v1383
        %v1385 = vpop.f32.mrf.mxu0
        %v1386 = vpop.f32.mrf.mxu0
        %v1387 = vpop.f32.mrf.mxu0
        %1388 = vdwg.mxu0
        %1389 = vrot.lane.b32.xlu0 %v798, 112
        %v1390 = vpop.permute.xlu0 %1389
        %1391 = vrot.lane.b32.xlu0 %v804, 112
        %v1392 = vpop.permute.xlu0 %1391
        %v1394 = vsel %vm811, %v1390, 0
        %v1397 = vsel %vm811, %v1392, 0
        %1399 = vmatprep.subr.bf16.mxu0 0
        %1400 = vmatpush1.bf16.xpose.msra.mxu0 0
        %1401 = vmatprep.subr.bf16.mxu0 0
        %1402 = vmatpush1.bf16.xpose.msra.mxu0 0
        %1403 = vmatprep.subr.bf16.mxu0 0
        %1404 = vmatpush1.bf16.xpose.msra.mxu0 0
        %1405 = vmatprep.subr.bf16.mxu0 0
        %1406 = vmatpush1.bf16.xpose.msra.mxu0 0
        %1407 = vmatprep.subr.bf16.mxu0 0
        %1408 = vmatpush1.bf16.xpose.msra.mxu0 0
        %1409 = vmatprep.subr.bf16.mxu0 0
        %1410 = vmatpush1.bf16.xpose.msra.mxu0 0
        %1411 = vmatprep.subr.bf16.mxu0 0
        %1412 = vmatpush1.bf16.xpose.msra.mxu0 0
        %1413 = vmatprep.subr.bf16.mxu0 0
        %1414 = vmatpush1.bf16.xpose.msra.mxu0 %v1397
        %1415 = vmatprep.subr.bf16.mxu0 0
        %1416 = vmatpush2.bf16.xpose.msra.mxu0 0
        %1417 = vmatprep.subr.bf16.mxu0 0
        %1418 = vmatpush2.bf16.xpose.msra.mxu0 0
        %1419 = vmatprep.subr.bf16.mxu0 0
        %1420 = vmatpush2.bf16.xpose.msra.mxu0 0
        %1421 = vmatprep.subr.bf16.mxu0 0
        %1422 = vmatpush2.bf16.xpose.msra.mxu0 0
        %1423 = vmatprep.subr.bf16.mxu0 0
        %1424 = vmatpush2.bf16.xpose.msra.mxu0 0
        %1425 = vmatprep.subr.bf16.mxu0 0
        %1426 = vmatpush2.bf16.xpose.msra.mxu0 0
        %1427 = vmatprep.subr.bf16.mxu0 0
        %1428 = vmatpush2.bf16.xpose.msra.mxu0 0
        %1429 = vmatprep.subr.bf16.mxu0 0
        %1430 = vmatpush2.bf16.xpose.msra.mxu0 0
        %1431 = vmatprep.mubr.bf16.mxu0 0
        %1432 = vmatmul.mubr.bf16.gmra.mxu0 %v1394
        %v1433 = vpop.f32.mrf.mxu0
        %v1434 = vadd.f32 0.0, %v1433
        %v1435 = vpop.f32.mrf.mxu0
        %v1436 = vpop.f32.mrf.mxu0
        %v1437 = vpop.f32.mrf.mxu0
        %1438 = vdwg.mxu0
        %v1439 = vsel %vm811, %v1384, -inf
        %1440 = vmax.xlane.f32.xlu0 %v1439
        %v1441 = vpop.xlane.xlu0 %1440
        %v1442 = vsel %vm811, %v1434, -inf
        %1443 = vmax.xlane.f32.xlu0 %v1442
        %v1444 = vpop.xlane.xlu0 %1443
        %v1445 = vsub.f32 %v1384, %v1441
        %v1446 = vsub.f32 %v1434, %v1444
        %v1447 = vmul.f32 %v1445, 1.442695
        %v1448 = vpow.pop %v1447
        %v1449 = vmul.f32 %v1446, 1.442695
        %v1450 = vpow.pop %v1449
        %v1451 = vsel %vm811, %v1448, 0.0
        %1452 = vadd.xlane.f32.xlu0 %v1451
        %v1453 = vpop.xlane.xlu0 %1452
        %v1454 = vsel %vm811, %v1450, 0.0
        %1455 = vadd.xlane.f32.xlu0 %v1454
        %v1456 = vpop.xlane.xlu0 %1455
        %v1457 = vpack.c.bf16 %v1448, %v1448
        %v1458 = vpack.c.bf16 %v1450, %v1450
        %1459 = vrot.lane.b32.xlu0 %v809, 112
        %v1460 = vpop.permute.xlu0 %1459
        %v1462 = vsel %vm811, %v1457, 0
        %v1465 = vsel %vm927, %v1460, 0
        %1467 = vmatprep.subr.bf16.mxu0 0
        %1468 = vmatpush1.bf16.msra.mxu0 0
        %1469 = vmatprep.subr.bf16.mxu0 0
        %1470 = vmatpush1.bf16.msra.mxu0 0
        %1471 = vmatprep.subr.bf16.mxu0 0
        %1472 = vmatpush1.bf16.msra.mxu0 0
        %1473 = vmatprep.subr.bf16.mxu0 0
        %1474 = vmatpush1.bf16.msra.mxu0 0
        %1475 = vmatprep.subr.bf16.mxu0 0
        %1476 = vmatpush1.bf16.msra.mxu0 0
        %1477 = vmatprep.subr.bf16.mxu0 0
        %1478 = vmatpush1.bf16.msra.mxu0 0
        %1479 = vmatprep.subr.bf16.mxu0 0
        %1480 = vmatpush1.bf16.msra.mxu0 0
        %1481 = vmatprep.subr.bf16.mxu0 0
        %1482 = vmatpush1.bf16.msra.mxu0 %v1465
        %1483 = vmatprep.subr.bf16.mxu0 0
        %1484 = vmatpush2.bf16.msra.mxu0 0
        %1485 = vmatprep.subr.bf16.mxu0 0
        %1486 = vmatpush2.bf16.msra.mxu0 0
        %1487 = vmatprep.subr.bf16.mxu0 0
        %1488 = vmatpush2.bf16.msra.mxu0 0
        %1489 = vmatprep.subr.bf16.mxu0 0
        %1490 = vmatpush2.bf16.msra.mxu0 0
        %1491 = vmatprep.subr.bf16.mxu0 0
        %1492 = vmatpush2.bf16.msra.mxu0 0
        %1493 = vmatprep.subr.bf16.mxu0 0
        %1494 = vmatpush2.bf16.msra.mxu0 0
        %1495 = vmatprep.subr.bf16.mxu0 0
        %1496 = vmatpush2.bf16.msra.mxu0 0
        %1497 = vmatprep.subr.bf16.mxu0 0
        %1498 = vmatpush2.bf16.msra.mxu0 0
        %1499 = vmatprep.mubr.bf16.mxu0 0
        %1500 = vmatmul.mubr.bf16.gmra.mxu0 %v1462
        %v1501 = vpop.f32.mrf.mxu0
        %v1502 = vadd.f32 0.0, %v1501
        %v1503 = vpop.f32.mrf.mxu0
        %v1504 = vpop.f32.mrf.mxu0
        %v1505 = vpop.f32.mrf.mxu0
        %1506 = vdwg.mxu0
        %1507 = vrot.lane.b32.xlu0 %v810, 112
        %v1508 = vpop.permute.xlu0 %1507
        %v1510 = vsel %vm811, %v1458, 0
        %v1513 = vsel %vm927, %v1508, 0
        %1515 = vmatprep.subr.bf16.mxu0 0
        %1516 = vmatpush1.bf16.msra.mxu0 0
        %1517 = vmatprep.subr.bf16.mxu0 0
        %1518 = vmatpush1.bf16.msra.mxu0 0
        %1519 = vmatprep.subr.bf16.mxu0 0
        %1520 = vmatpush1.bf16.msra.mxu0 0
        %1521 = vmatprep.subr.bf16.mxu0 0
        %1522 = vmatpush1.bf16.msra.mxu0 0
        %1523 = vmatprep.subr.bf16.mxu0 0
        %1524 = vmatpush1.bf16.msra.mxu0 0
        %1525 = vmatprep.subr.bf16.mxu0 0
        %1526 = vmatpush1.bf16.msra.mxu0 0
        %1527 = vmatprep.subr.bf16.mxu0 0
        %1528 = vmatpush1.bf16.msra.mxu0 0
        %1529 = vmatprep.subr.bf16.mxu0 0
        %1530 = vmatpush1.bf16.msra.mxu0 %v1513
        %1531 = vmatprep.subr.bf16.mxu0 0
        %1532 = vmatpush2.bf16.msra.mxu0 0
        %1533 = vmatprep.subr.bf16.mxu0 0
        %1534 = vmatpush2.bf16.msra.mxu0 0
        %1535 = vmatprep.subr.bf16.mxu0 0
        %1536 = vmatpush2.bf16.msra.mxu0 0
        %1537 = vmatprep.subr.bf16.mxu0 0
        %1538 = vmatpush2.bf16.msra.mxu0 0
        %1539 = vmatprep.subr.bf16.mxu0 0
        %1540 = vmatpush2.bf16.msra.mxu0 0
        %1541 = vmatprep.subr.bf16.mxu0 0
        %1542 = vmatpush2.bf16.msra.mxu0 0
        %1543 = vmatprep.subr.bf16.mxu0 0
        %1544 = vmatpush2.bf16.msra.mxu0 0
        %1545 = vmatprep.subr.bf16.mxu0 0
        %1546 = vmatpush2.bf16.msra.mxu0 0
        %1547 = vmatprep.mubr.bf16.mxu0 0
        %1548 = vmatmul.mubr.bf16.gmra.mxu0 %v1510
        %v1549 = vpop.f32.mrf.mxu0
        %v1550 = vadd.f32 0.0, %v1549
        %v1551 = vpop.f32.mrf.mxu0
        %v1552 = vpop.f32.mrf.mxu0
        %v1553 = vpop.f32.mrf.mxu0
        %1554 = vdwg.mxu0
        %v1555 = vrcp.pop %v1453
        %v1556 = vrcp.pop %v1456
        %v1557 = vmul.f32 %v1502, %v1555
        %v1558 = vmul.f32 %v1550, %v1556
        %v1559 = vpack.c.bf16 %v1558, %v1557
        %v1560 = vld [vmem:[%s9 + $0x8] sm:$0xf]
        %v1562 = vsel %vm811, %v1559, 0
        %v1565 = vsel %vm927, %v1560, 0
        %1567 = vmatprep.subr.bf16.mxu0 0
        %1568 = vmatpush1.bf16.msra.mxu0 0
        %1569 = vmatprep.subr.bf16.mxu0 0
        %1570 = vmatpush1.bf16.msra.mxu0 0
        %1571 = vmatprep.subr.bf16.mxu0 0
        %1572 = vmatpush1.bf16.msra.mxu0 0
        %1573 = vmatprep.subr.bf16.mxu0 0
        %1574 = vmatpush1.bf16.msra.mxu0 0
        %1575 = vmatprep.subr.bf16.mxu0 0
        %1576 = vmatpush1.bf16.msra.mxu0 0
        %1577 = vmatprep.subr.bf16.mxu0 0
        %1578 = vmatpush1.bf16.msra.mxu0 0
        %1579 = vmatprep.subr.bf16.mxu0 0
        %1580 = vmatpush1.bf16.msra.mxu0 0
        %1581 = vmatprep.subr.bf16.mxu0 0
        %1582 = vmatpush1.bf16.msra.mxu0 %v1565
        %1583 = vmatprep.subr.bf16.mxu0 0
        %1584 = vmatpush2.bf16.msra.mxu0 0
        %1585 = vmatprep.subr.bf16.mxu0 0
        %1586 = vmatpush2.bf16.msra.mxu0 0
        %1587 = vmatprep.subr.bf16.mxu0 0
        %1588 = vmatpush2.bf16.msra.mxu0 0
        %1589 = vmatprep.subr.bf16.mxu0 0
        %1590 = vmatpush2.bf16.msra.mxu0 0
        %1591 = vmatprep.subr.bf16.mxu0 0
        %1592 = vmatpush2.bf16.msra.mxu0 0
        %1593 = vmatprep.subr.bf16.mxu0 0
        %1594 = vmatpush2.bf16.msra.mxu0 0
        %1595 = vmatprep.subr.bf16.mxu0 0
        %1596 = vmatpush2.bf16.msra.mxu0 0
        %1597 = vmatprep.subr.bf16.mxu0 0
        %1598 = vmatpush2.bf16.msra.mxu0 0
        %1599 = vmatprep.mubr.bf16.mxu0 0
        %1600 = vmatmul.mubr.bf16.gmra.mxu0 %v1562
        %v1601 = vpop.f32.mrf.mxu0
        %v1602 = vadd.f32 0.0, %v1601
        %v1603 = vpop.f32.mrf.mxu0
        %v1604 = vpop.f32.mrf.mxu0
        %v1605 = vadd.f32 0.0, %v1604
        %v1606 = vpop.f32.mrf.mxu0
        %1607 = vdwg.mxu0
        %v1608 = vadd.f32 %v1333, %v1602
        %v1609 = vadd.f32 %v1336, %v1605
        %1610 = vrot.lane.b32.xlu0 %v797, 104
        %v1611 = vpop.permute.xlu0 %1610
        %1612 = vrot.lane.b32.xlu0 %v803, 104
        %v1613 = vpop.permute.xlu0 %1612
        %v1615 = vsel %vm811, %v1611, 0
        %v1618 = vsel %vm811, %v1613, 0
        %1620 = vmatprep.subr.bf16.mxu0 0
        %1621 = vmatpush1.bf16.xpose.msra.mxu0 0
        %1622 = vmatprep.subr.bf16.mxu0 0
        %1623 = vmatpush1.bf16.xpose.msra.mxu0 0
        %1624 = vmatprep.subr.bf16.mxu0 0
        %1625 = vmatpush1.bf16.xpose.msra.mxu0 0
        %1626 = vmatprep.subr.bf16.mxu0 0
        %1627 = vmatpush1.bf16.xpose.msra.mxu0 0
        %1628 = vmatprep.subr.bf16.mxu0 0
        %1629 = vmatpush1.bf16.xpose.msra.mxu0 0
        %1630 = vmatprep.subr.bf16.mxu0 0
        %1631 = vmatpush1.bf16.xpose.msra.mxu0 0
        %1632 = vmatprep.subr.bf16.mxu0 0
        %1633 = vmatpush1.bf16.xpose.msra.mxu0 0
        %1634 = vmatprep.subr.bf16.mxu0 0
        %1635 = vmatpush1.bf16.xpose.msra.mxu0 %v1618
        %1636 = vmatprep.subr.bf16.mxu0 0
        %1637 = vmatpush2.bf16.xpose.msra.mxu0 0
        %1638 = vmatprep.subr.bf16.mxu0 0
        %1639 = vmatpush2.bf16.xpose.msra.mxu0 0
        %1640 = vmatprep.subr.bf16.mxu0 0
        %1641 = vmatpush2.bf16.xpose.msra.mxu0 0
        %1642 = vmatprep.subr.bf16.mxu0 0
        %1643 = vmatpush2.bf16.xpose.msra.mxu0 0
        %1644 = vmatprep.subr.bf16.mxu0 0
        %1645 = vmatpush2.bf16.xpose.msra.mxu0 0
        %1646 = vmatprep.subr.bf16.mxu0 0
        %1647 = vmatpush2.bf16.xpose.msra.mxu0 0
        %1648 = vmatprep.subr.bf16.mxu0 0
        %1649 = vmatpush2.bf16.xpose.msra.mxu0 0
        %1650 = vmatprep.subr.bf16.mxu0 0
        %1651 = vmatpush2.bf16.xpose.msra.mxu0 0
        %1652 = vmatprep.mubr.bf16.mxu0 0
        %1653 = vmatmul.mubr.bf16.gmra.mxu0 %v1615
        %v1654 = vpop.f32.mrf.mxu0
        %v1655 = vadd.f32 0.0, %v1654
        %v1656 = vpop.f32.mrf.mxu0
        %v1657 = vpop.f32.mrf.mxu0
        %v1658 = vpop.f32.mrf.mxu0
        %1659 = vdwg.mxu0
        %1660 = vrot.lane.b32.xlu0 %v798, 104
        %v1661 = vpop.permute.xlu0 %1660
        %1662 = vrot.lane.b32.xlu0 %v804, 104
        %v1663 = vpop.permute.xlu0 %1662
        %v1665 = vsel %vm811, %v1661, 0
        %v1668 = vsel %vm811, %v1663, 0
        %1670 = vmatprep.subr.bf16.mxu0 0
        %1671 = vmatpush1.bf16.xpose.msra.mxu0 0
        %1672 = vmatprep.subr.bf16.mxu0 0
        %1673 = vmatpush1.bf16.xpose.msra.mxu0 0
        %1674 = vmatprep.subr.bf16.mxu0 0
        %1675 = vmatpush1.bf16.xpose.msra.mxu0 0
        %1676 = vmatprep.subr.bf16.mxu0 0
        %1677 = vmatpush1.bf16.xpose.msra.mxu0 0
        %1678 = vmatprep.subr.bf16.mxu0 0
        %1679 = vmatpush1.bf16.xpose.msra.mxu0 0
        %1680 = vmatprep.subr.bf16.mxu0 0
        %1681 = vmatpush1.bf16.xpose.msra.mxu0 0
        %1682 = vmatprep.subr.bf16.mxu0 0
        %1683 = vmatpush1.bf16.xpose.msra.mxu0 0
        %1684 = vmatprep.subr.bf16.mxu0 0
        %1685 = vmatpush1.bf16.xpose.msra.mxu0 %v1668
        %1686 = vmatprep.subr.bf16.mxu0 0
        %1687 = vmatpush2.bf16.xpose.msra.mxu0 0
        %1688 = vmatprep.subr.bf16.mxu0 0
        %1689 = vmatpush2.bf16.xpose.msra.mxu0 0
        %1690 = vmatprep.subr.bf16.mxu0 0
        %1691 = vmatpush2.bf16.xpose.msra.mxu0 0
        %1692 = vmatprep.subr.bf16.mxu0 0
        %1693 = vmatpush2.bf16.xpose.msra.mxu0 0
        %1694 = vmatprep.subr.bf16.mxu0 0
        %1695 = vmatpush2.bf16.xpose.msra.mxu0 0
        %1696 = vmatprep.subr.bf16.mxu0 0
        %1697 = vmatpush2.bf16.xpose.msra.mxu0 0
        %1698 = vmatprep.subr.bf16.mxu0 0
        %1699 = vmatpush2.bf16.xpose.msra.mxu0 0
        %1700 = vmatprep.subr.bf16.mxu0 0
        %1701 = vmatpush2.bf16.xpose.msra.mxu0 0
        %1702 = vmatprep.mubr.bf16.mxu0 0
        %1703 = vmatmul.mubr.bf16.gmra.mxu0 %v1665
        %v1704 = vpop.f32.mrf.mxu0
        %v1705 = vadd.f32 0.0, %v1704
        %v1706 = vpop.f32.mrf.mxu0
        %v1707 = vpop.f32.mrf.mxu0
        %v1708 = vpop.f32.mrf.mxu0
        %1709 = vdwg.mxu0
        %v1710 = vsel %vm811, %v1655, -inf
        %1711 = vmax.xlane.f32.xlu0 %v1710
        %v1712 = vpop.xlane.xlu0 %1711
        %v1713 = vsel %vm811, %v1705, -inf
        %1714 = vmax.xlane.f32.xlu0 %v1713
        %v1715 = vpop.xlane.xlu0 %1714
        %v1716 = vsub.f32 %v1655, %v1712
        %v1717 = vsub.f32 %v1705, %v1715
        %v1718 = vmul.f32 %v1716, 1.442695
        %v1719 = vpow.pop %v1718
        %v1720 = vmul.f32 %v1717, 1.442695
        %v1721 = vpow.pop %v1720
        %v1722 = vsel %vm811, %v1719, 0.0
        %1723 = vadd.xlane.f32.xlu0 %v1722
        %v1724 = vpop.xlane.xlu0 %1723
        %v1725 = vsel %vm811, %v1721, 0.0
        %1726 = vadd.xlane.f32.xlu0 %v1725
        %v1727 = vpop.xlane.xlu0 %1726
        %v1728 = vpack.c.bf16 %v1719, %v1719
        %v1729 = vpack.c.bf16 %v1721, %v1721
        %1730 = vrot.lane.b32.xlu0 %v809, 104
        %v1731 = vpop.permute.xlu0 %1730
        %v1733 = vsel %vm811, %v1728, 0
        %v1736 = vsel %vm927, %v1731, 0
        %1738 = vmatprep.subr.bf16.mxu0 0
        %1739 = vmatpush1.bf16.msra.mxu0 0
        %1740 = vmatprep.subr.bf16.mxu0 0
        %1741 = vmatpush1.bf16.msra.mxu0 0
        %1742 = vmatprep.subr.bf16.mxu0 0
        %1743 = vmatpush1.bf16.msra.mxu0 0
        %1744 = vmatprep.subr.bf16.mxu0 0
        %1745 = vmatpush1.bf16.msra.mxu0 0
        %1746 = vmatprep.subr.bf16.mxu0 0
        %1747 = vmatpush1.bf16.msra.mxu0 0
        %1748 = vmatprep.subr.bf16.mxu0 0
        %1749 = vmatpush1.bf16.msra.mxu0 0
        %1750 = vmatprep.subr.bf16.mxu0 0
        %1751 = vmatpush1.bf16.msra.mxu0 0
        %1752 = vmatprep.subr.bf16.mxu0 0
        %1753 = vmatpush1.bf16.msra.mxu0 %v1736
        %1754 = vmatprep.subr.bf16.mxu0 0
        %1755 = vmatpush2.bf16.msra.mxu0 0
        %1756 = vmatprep.subr.bf16.mxu0 0
        %1757 = vmatpush2.bf16.msra.mxu0 0
        %1758 = vmatprep.subr.bf16.mxu0 0
        %1759 = vmatpush2.bf16.msra.mxu0 0
        %1760 = vmatprep.subr.bf16.mxu0 0
        %1761 = vmatpush2.bf16.msra.mxu0 0
        %1762 = vmatprep.subr.bf16.mxu0 0
        %1763 = vmatpush2.bf16.msra.mxu0 0
        %1764 = vmatprep.subr.bf16.mxu0 0
        %1765 = vmatpush2.bf16.msra.mxu0 0
        %1766 = vmatprep.subr.bf16.mxu0 0
        %1767 = vmatpush2.bf16.msra.mxu0 0
        %1768 = vmatprep.subr.bf16.mxu0 0
        %1769 = vmatpush2.bf16.msra.mxu0 0
        %1770 = vmatprep.mubr.bf16.mxu0 0
        %1771 = vmatmul.mubr.bf16.gmra.mxu0 %v1733
        %v1772 = vpop.f32.mrf.mxu0
        %v1773 = vadd.f32 0.0, %v1772
        %v1774 = vpop.f32.mrf.mxu0
        %v1775 = vpop.f32.mrf.mxu0
        %v1776 = vpop.f32.mrf.mxu0
        %1777 = vdwg.mxu0
        %1778 = vrot.lane.b32.xlu0 %v810, 104
        %v1779 = vpop.permute.xlu0 %1778
        %v1781 = vsel %vm811, %v1729, 0
        %v1784 = vsel %vm927, %v1779, 0
        %1786 = vmatprep.subr.bf16.mxu0 0
        %1787 = vmatpush1.bf16.msra.mxu0 0
        %1788 = vmatprep.subr.bf16.mxu0 0
        %1789 = vmatpush1.bf16.msra.mxu0 0
        %1790 = vmatprep.subr.bf16.mxu0 0
        %1791 = vmatpush1.bf16.msra.mxu0 0
        %1792 = vmatprep.subr.bf16.mxu0 0
        %1793 = vmatpush1.bf16.msra.mxu0 0
        %1794 = vmatprep.subr.bf16.mxu0 0
        %1795 = vmatpush1.bf16.msra.mxu0 0
        %1796 = vmatprep.subr.bf16.mxu0 0
        %1797 = vmatpush1.bf16.msra.mxu0 0
        %1798 = vmatprep.subr.bf16.mxu0 0
        %1799 = vmatpush1.bf16.msra.mxu0 0
        %1800 = vmatprep.subr.bf16.mxu0 0
        %1801 = vmatpush1.bf16.msra.mxu0 %v1784
        %1802 = vmatprep.subr.bf16.mxu0 0
        %1803 = vmatpush2.bf16.msra.mxu0 0
        %1804 = vmatprep.subr.bf16.mxu0 0
        %1805 = vmatpush2.bf16.msra.mxu0 0
        %1806 = vmatprep.subr.bf16.mxu0 0
        %1807 = vmatpush2.bf16.msra.mxu0 0
        %1808 = vmatprep.subr.bf16.mxu0 0
        %1809 = vmatpush2.bf16.msra.mxu0 0
        %1810 = vmatprep.subr.bf16.mxu0 0
        %1811 = vmatpush2.bf16.msra.mxu0 0
        %1812 = vmatprep.subr.bf16.mxu0 0
        %1813 = vmatpush2.bf16.msra.mxu0 0
        %1814 = vmatprep.subr.bf16.mxu0 0
        %1815 = vmatpush2.bf16.msra.mxu0 0
        %1816 = vmatprep.subr.bf16.mxu0 0
        %1817 = vmatpush2.bf16.msra.mxu0 0
        %1818 = vmatprep.mubr.bf16.mxu0 0
        %1819 = vmatmul.mubr.bf16.gmra.mxu0 %v1781
        %v1820 = vpop.f32.mrf.mxu0
        %v1821 = vadd.f32 0.0, %v1820
        %v1822 = vpop.f32.mrf.mxu0
        %v1823 = vpop.f32.mrf.mxu0
        %v1824 = vpop.f32.mrf.mxu0
        %1825 = vdwg.mxu0
        %v1826 = vrcp.pop %v1724
        %v1827 = vrcp.pop %v1727
        %v1828 = vmul.f32 %v1773, %v1826
        %v1829 = vmul.f32 %v1821, %v1827
        %v1830 = vpack.c.bf16 %v1829, %v1828
        %v1831 = vld [vmem:[%s9 + $0xc] sm:$0xf]
        %v1833 = vsel %vm811, %v1830, 0
        %v1836 = vsel %vm927, %v1831, 0
        %1838 = vmatprep.subr.bf16.mxu0 0
        %1839 = vmatpush1.bf16.msra.mxu0 0
        %1840 = vmatprep.subr.bf16.mxu0 0
        %1841 = vmatpush1.bf16.msra.mxu0 0
        %1842 = vmatprep.subr.bf16.mxu0 0
        %1843 = vmatpush1.bf16.msra.mxu0 0
        %1844 = vmatprep.subr.bf16.mxu0 0
        %1845 = vmatpush1.bf16.msra.mxu0 0
        %1846 = vmatprep.subr.bf16.mxu0 0
        %1847 = vmatpush1.bf16.msra.mxu0 0
        %1848 = vmatprep.subr.bf16.mxu0 0
        %1849 = vmatpush1.bf16.msra.mxu0 0
        %1850 = vmatprep.subr.bf16.mxu0 0
        %1851 = vmatpush1.bf16.msra.mxu0 0
        %1852 = vmatprep.subr.bf16.mxu0 0
        %1853 = vmatpush1.bf16.msra.mxu0 %v1836
        %1854 = vmatprep.subr.bf16.mxu0 0
        %1855 = vmatpush2.bf16.msra.mxu0 0
        %1856 = vmatprep.subr.bf16.mxu0 0
        %1857 = vmatpush2.bf16.msra.mxu0 0
        %1858 = vmatprep.subr.bf16.mxu0 0
        %1859 = vmatpush2.bf16.msra.mxu0 0
        %1860 = vmatprep.subr.bf16.mxu0 0
        %1861 = vmatpush2.bf16.msra.mxu0 0
        %1862 = vmatprep.subr.bf16.mxu0 0
        %1863 = vmatpush2.bf16.msra.mxu0 0
        %1864 = vmatprep.subr.bf16.mxu0 0
        %1865 = vmatpush2.bf16.msra.mxu0 0
        %1866 = vmatprep.subr.bf16.mxu0 0
        %1867 = vmatpush2.bf16.msra.mxu0 0
        %1868 = vmatprep.subr.bf16.mxu0 0
        %1869 = vmatpush2.bf16.msra.mxu0 0
        %1870 = vmatprep.mubr.bf16.mxu0 0
        %1871 = vmatmul.mubr.bf16.gmra.mxu0 %v1833
        %v1872 = vpop.f32.mrf.mxu0
        %v1873 = vadd.f32 0.0, %v1872
        %v1874 = vpop.f32.mrf.mxu0
        %v1875 = vpop.f32.mrf.mxu0
        %v1876 = vadd.f32 0.0, %v1875
        %v1877 = vpop.f32.mrf.mxu0
        %1878 = vdwg.mxu0
        %v1879 = vadd.f32 %v1608, %v1873
        %v1880 = vadd.f32 %v1609, %v1876
        %v1881 = vld [vmem:[%s10] sm:$0x1]
        %v1883 = vlaneseq
        %v1884 = vshrl.u32 %v1883, 7
        %v1885 = vsub.s32 0, %v1884
        %v1886 = vrot.slane %v1881, %v1885
        %v1888 = vadd.f32 %v1879, %v1886
        %v1889 = vadd.f32 %v1880, %v1886
        %1890 = vst.msk [vmem:[%s562] sm:$0xff] %vm602, %v1888
        %1891 = vst.msk [vmem:[%s562 + $0x8] sm:$0xff] %vm602, %v1889
        %s1892 = sand.u32 %s288, 1
        %s1893 = scalar_lea.sflag [#allocation4], %s1892
        %s1894 = sand.u32 %s288, 1
        %s1895 = smul.addr %s1894, 16
        %s1896 = scalar_lea.vmem [#allocation17], %s1895
        // Predicated region
        $region101: #{tpu_custom_call.1} parent=63 // pred_check
          %p1897 = pneg %p298
        $region102: #{tpu_custom_call.1} parent=63 // pred_check_branch
          %1899 = sbr.rel (%p1897) target = $region104
        $region103: #{tpu_custom_call.1} parent=63 // pred_region
          %s1900 = smul.u32 2, %s34
          %s1902 = ssub.s32 256, 256
          %1903 = vsyncadd %s1893, %s1902
          %s1904 = smul.addr %s1900, 128
          %s1905 = scalar_lea.hbm %s11, %s1904
          %s1906 = sshll.u32 %s1896, 4
          %s1907 = int_to_ptr.vmem [resolvable:$true] %s1906
          %1912 = dma.vmem_to_hbm [thread:$0]  %s1907, 256, %s1905, %s1893, 128, 128, 8
        $region104: #{tpu_custom_call.1} parent=63 // pred_fallthru
          _
      $region64: #{tpu_custom_call.1} parent=5 // pred_fallthru
        _
      %p1913 = scmp.le.s32.totalorder 2, %s29
      // Predicated region
      $region105: #{tpu_custom_call.1} parent=5 // pred_check
        %p1914 = pneg %p1913
      $region106: #{tpu_custom_call.1} parent=5 // pred_check_branch
        %1916 = sbr.rel (%p1914) target = $region108
      $region107: #{tpu_custom_call.1} parent=5 // pred_region
        %s1917 = ssub.s32 %s29, 2
        // Predicated region
        $region109: #{tpu_custom_call.1} parent=107 // pred_check
          %p1918 = pneg %p304
        $region110: #{tpu_custom_call.1} parent=107 // pred_check_branch
          %1920 = sbr.rel (%p1918) target = $region112
        $region111: #{tpu_custom_call.1} parent=107 // pred_region
          %s1921 = sand.u32 %s289, 1
          %s1922 = scalar_lea.sflag [#allocation4], %s1921
          %s1923 = sand.u32 %s289, 1
          %s1924 = smul.addr %s1923, 16
          %s1925 = scalar_lea.vmem [#allocation17], %s1924
          %1926 = dma.done %s1922, 256
        $region112: #{tpu_custom_call.1} parent=107 // pred_fallthru
          _
      $region108: #{tpu_custom_call.1} parent=5 // pred_fallthru
        _
    $region6: #{tpu_custom_call.1} parent=1 // loop_footer
      %s33 = sadd.s32 1, %s29
    $region7: #{tpu_custom_call.1} parent=1 // loop_footer_branch
      %28 = sbr.rel target = $region3
    $region8: #{tpu_custom_call.1} parent=1 // loop_exit
      _
    %1927 = vsyncpa [#allocation3], 1
    %s1928 = scalar_lea.sflag [#allocation3], 1
    %1929 = vsyncpa %s1928, 1
    %1930 = vsyncpa [#allocation6], 1
    %s1931 = scalar_lea.sflag [#allocation6], 1
    %1932 = vsyncpa %s1931, 1
    %1933 = vsyncpa [#allocation9], 1
    %1934 = vsyncpa [#allocation12], 1
    %1935 = vsyncpa [#allocation15], 1
    %1936 = vsyncpa [#allocation4], 1
    %s1937 = scalar_lea.sflag [#allocation4], 1
    %1938 = vsyncpa %s1937, 1

</llo_original>
